<compile_context>
chip_gen: v7x
topology: tpu7x:2x2x1
jax: 0.10.0
libtpu: 0.0.40
codegen_flags: <defaults>
</compile_context>

<pallas_src>
import jax
import jax.numpy as jnp
from jax.experimental import pallas as pl
from jax.experimental.pallas import tpu as pltpu

LEAKY_SLOPE = 0.2
BN_EPS = 1e-5

TM_CAP = 2048                      # lanes (M = N*Ho*Wo) per block
VMEM_LIMIT_BYTES = 32 * 1024 * 1024  # explicit budget, safe on v5e/v6e/v7x


def _round_up(x, m):
    return (x + m - 1) // m * m


def _pick_tile(dim, cap, align):
    """Return (tile, padded_dim) with tile % align == 0 and tile | padded_dim."""
    d = _round_up(dim, align)
    if d <= cap:
        return d, d
    return cap, _round_up(dim, cap)


def _apply_act(x, act):
    if act == "leaky":
        return jnp.where(x >= 0, x, LEAKY_SLOPE * x)
    if act == "sigmoid":
        # Numerically stable sigmoid; exp + approx reciprocal both land on the EUP.
        z = jnp.exp(-jnp.abs(x))
        num = jnp.where(x >= 0, 1.0, z)
        return num * pl.reciprocal(1.0 + z, approx=True)
    return x


# ----------------------------------------------------------------------------
# Pallas kernels
# ----------------------------------------------------------------------------

def conv_mm_t(x_t, w_t, b=None, *, m_actual, act=None, bn=None,
              gamma=None, beta=None, out_dtype=jnp.bfloat16):
    """Transposed conv matmul  Y[Np, Mp] = W[Np, Kp] @ X[Kp, Mp]  with fused epilogue.

    x_t:   [Kp, Mp] bf16 im2col patches (M zero-padded), K = 16*Cin (full, no K grid axis).
    w_t:   [Np, Kp] bf16 weights, Np = Cout padded to a multiple of 16 (sublanes).
    b/gamma/beta: [Np, 1] f32.
    act:   None | "leaky" | "sigmoid"
    bn:    None     -> bias + act
           "fused"  -> full train-mode BN + act in the epilogue (requires gm == 1, no bias)
           "stats"  -> also emit per-M-block partial (sum, sumsq); act deferred (no bias).
    """
    Kp, Mp = x_t.shape
    Np, Kp2 = w_t.shape
    assert Kp == Kp2
    tm = Mp if Mp <= TM_CAP else TM_CAP
    assert Mp % tm == 0
    gm = Mp // tm
    if bn == "fused":
        assert gm == 1, "fused BN epilogue needs the whole M axis in one block"

    def kernel(*refs):
        if bn == "fused":
            x_ref, w_ref, g_ref, be_ref, y_ref = refs
        elif bn == "stats":
            x_ref, w_ref, y_ref, ssum_ref, ssq_ref = refs
        else:
            x_ref, w_ref, b_ref, y_ref = refs

        # Single full-K MXU matmul; f32 accumulation.  [Np, tm]
        acc = jnp.dot(w_ref[...], x_ref[...], preferred_element_type=jnp.float32)

        if bn is None:
            out = acc + b_ref[...]                      # [Np,1] broadcasts along lanes
            y_ref[...] = _apply_act(out, act).astype(y_ref.dtype)

        elif bn == "fused":
            # Whole M in this block: train-mode batch stats (biased variance) over the
            # valid lanes, normalize + activation here.  (Bias omitted: BN cancels it.)
            if m_actual == tm:
                yv = acc
            else:
                col = jax.lax.broadcasted_iota(jnp.int32, acc.shape, 1)
                yv = jnp.where(col < m_actual, acc, 0.0)
            inv_m = 1.0 / float(m_actual)
            mean = jnp.sum(yv, axis=1, keepdims=True) * inv_m
            var = jnp.sum(yv * yv, axis=1, keepdims=True) * inv_m - mean * mean
            var = jnp.maximum(var, 0.0)
            scale = g_ref[...] * jax.lax.rsqrt(var + BN_EPS)
            out = (acc - mean) * scale + be_ref[...]
            y_ref[...] = _apply_act(out, act).astype(y_ref.dtype)

        else:  # "stats": per-block partial sums; M axis stays parallel (megacore-friendly).
            i = pl.program_id(0)
            if m_actual == Mp:
                yv = acc
            else:
                col = i * tm + jax.lax.broadcasted_iota(jnp.int32, acc.shape, 1)
                yv = jnp.where(col < m_actual, acc, 0.0)
            ssum_ref[...] = jnp.broadcast_to(
                jnp.sum(yv, axis=1, keepdims=True), ssum_ref.shape)
            ssq_ref[...] = jnp.broadcast_to(
                jnp.sum(yv * yv, axis=1, keepdims=True), ssq_ref.shape)
            y_ref[...] = acc.astype(y_ref.dtype)

    x_spec = pl.BlockSpec((Kp, tm), lambda i: (0, i))
    w_spec = pl.BlockSpec((Np, Kp), lambda i: (0, 0))
    vec_spec = pl.BlockSpec((Np, 1), lambda i: (0, 0))
    y_spec = pl.BlockSpec((Np, tm), lambda i: (0, i))

    if bn == "fused":
        inputs, in_specs = [x_t, w_t, gamma, beta], [x_spec, w_spec, vec_spec, vec_spec]
        out_shape = jax.ShapeDtypeStruct((Np, Mp), out_dtype)
        out_specs = y_spec
    elif bn == "stats":
        inputs, in_specs = [x_t, w_t], [x_spec, w_spec]
        out_shape = (jax.ShapeDtypeStruct((Np, Mp), out_dtype),
                     jax.ShapeDtypeStruct((Np, gm * 128), jnp.float32),
                     jax.ShapeDtypeStruct((Np, gm * 128), jnp.float32))
        out_specs = (y_spec,
                     pl.BlockSpec((Np, 128), lambda i: (0, i)),
                     pl.BlockSpec((Np, 128), lambda i: (0, i)))
    else:
        inputs, in_specs = [x_t, w_t, b], [x_spec, w_spec, vec_spec]
        out_shape = jax.ShapeDtypeStruct((Np, Mp), out_dtype)
        out_specs = y_spec

    return pl.pallas_call(
        kernel,
        out_shape=out_shape,
        grid=(gm,),
        in_specs=in_specs,
        out_specs=out_specs,
        compiler_params=pltpu.CompilerParams(
            dimension_semantics=("parallel",),
            vmem_limit_bytes=VMEM_LIMIT_BYTES),
    )(*inputs)


def bn_apply_act(y, scale, shift, *, out_dtype=jnp.bfloat16):
    """Second pass for the multi-M-block BN path: out = leaky(y * scale + shift)."""
    Np, Mp = y.shape
    tm = Mp if Mp <= TM_CAP else TM_CAP
    gm = Mp // tm

    def kernel(y_ref, sc_ref, sh_ref, o_ref):
        out = y_ref[...].astype(jnp.float32) * sc_ref[...] + sh_ref[...]
        out = jnp.where(out >= 0, out, LEAKY_SLOPE * out)
        o_ref[...] = out.astype(o_ref.dtype)

    return pl.pallas_call(
        kernel,
        out_shape=jax.ShapeDtypeStruct((Np, Mp), out_dtype),
        grid=(gm,),
        in_specs=[pl.BlockSpec((Np, tm), lambda i: (0, i)),
                  pl.BlockSpec((Np, 1), lambda i: (0, 0)),
                  pl.BlockSpec((Np, 1), lambda i: (0, 0))],
        out_specs=pl.BlockSpec((Np, tm), lambda i: (0, i)),
        compiler_params=pltpu.CompilerParams(
            dimension_semantics=("parallel",),
            vmem_limit_bytes=VMEM_LIMIT_BYTES),
    )(y, scale, shift)


# ----------------------------------------------------------------------------
# JAX glue: transposed im2col (pure data movement) and layer wrappers
# ----------------------------------------------------------------------------

def im2col_t(x_cnhw, ksize, stride, pad):
    """x: [C, N, H, W] -> patches^T [ksize*ksize*C, N*Ho*Wo] (K order (kh,kw,ci))."""
    c, n, h, w = x_cnhw.shape
    xp = jnp.pad(x_cnhw, ((0, 0), (0, 0), (pad, pad), (pad, pad)))
    hp, wp = h + 2 * pad, w + 2 * pad
    ho = (hp - ksize) // stride + 1
    wo = (wp - ksize) // stride + 1
    cols = []
    for kh in range(ksize):
        for kw in range(ksize):
            cols.append(xp[:, :, kh:kh + stride * (ho - 1) + 1:stride,
                           kw:kw + stride * (wo - 1) + 1:stride])
    patches = jnp.stack(cols, axis=0)            # [k*k, C, N, Ho, Wo]
    return patches.reshape(ksize * ksize * c, n * ho * wo), (n, ho, wo)
# TODO(synk): at very large image sizes the im2col patch matrix (4x/16x inflated) should be
#             formed inside the kernel via shifted-window index maps / halo DMA instead of
#             being materialized in HBM.


def conv_layer(x_cnhw, p, *, cout, stride, act, use_bn, out_dtype=jnp.bfloat16):
    x_t, (n, ho, wo) = im2col_t(x_cnhw, 4, stride, 1)
    k, m = x_t.shape
    tm, mp = _pick_tile(m, TM_CAP, 128)
    gm = mp // tm
    xp = jnp.pad(x_t.astype(jnp.bfloat16), ((0, 0), (0, mp - m)))

    if use_bn:
        if gm == 1:   # whole M in one block -> fully fused conv+BN+act kernel
            y = conv_mm_t(xp, p["w"], m_actual=m, act=act, bn="fused",
                          gamma=p["gamma"], beta=p["beta"], out_dtype=out_dtype)
        else:         # scalable path: per-block partial stats, M axis stays parallel
            y, ssum, ssq = conv_mm_t(xp, p["w"], m_actual=m, bn="stats",
                                     out_dtype=jnp.bfloat16)
            # Reduce the tiny [Np, gm] partials in plain JAX (one value per block at
            # lane stride 128) and fold BN into a single scale/shift pair.
            s = ssum[:, ::128].sum(axis=1, keepdims=True)
            q = ssq[:, ::128].sum(axis=1, keepdims=True)
            mean = s / m
            var = jnp.maximum(q / m - mean * mean, 0.0)
            scale = p["gamma"] * jax.lax.rsqrt(var + BN_EPS)
            shift = p["beta"] - mean * scale
            y = bn_apply_act(y, scale, shift, out_dtype=out_dtype)
    else:
        y = conv_mm_t(xp, p["w"], b=p["b"], m_actual=m, act=act, out_dtype=out_dtype)

    # [Cout_pad, Mp] -> [Cout, N, Ho, Wo]  (single fused slice+reshape copy; already the
    # [C, N, H, W] layout the next layer's im2col consumes -> no transposes between layers)
    return y[:cout, :m].reshape(cout, n, ho, wo)


def discriminator_forward(x_nchw, params):
    x = jnp.transpose(x_nchw, (1, 0, 2, 3)).astype(jnp.bfloat16)     # [C, N, H, W], bf16
    h = conv_layer(x, params["c1"], cout=8, stride=2, act="leaky", use_bn=False)
    h = conv_layer(h, params["c2"], cout=16, stride=2, act="leaky", use_bn=True)
    h = conv_layer(h, params["c3"], cout=32, stride=2, act="leaky", use_bn=True)
    h = conv_layer(h, params["c4"], cout=64, stride=1, act="leaky", use_bn=True)
    h = conv_layer(h, params["c5"], cout=1, stride=1, act="sigmoid", use_bn=False,
                   out_dtype=jnp.float32)
    return jnp.transpose(h, (1, 0, 2, 3))                            # NCHW [N, 1, Ho, Wo]


# ----------------------------------------------------------------------------
# Parameters (deterministic init) + hoisted weight-layout preparation
# ----------------------------------------------------------------------------

def _prep_conv(w, b, gamma=None, beta=None):
    """Done-once transform: [Cout,Cin,4,4] -> bf16 [Cout_pad, K] with K in (kh,kw,ci) order;
    bias/gamma/beta padded to [Cout_pad, 1] f32 (Cout_pad = multiple of 16 sublanes)."""
    cout, cin, kh, kw = w.shape
    k = kh * kw * cin
    npad = _round_up(cout, 16)
    wt = jnp.transpose(w, (0, 2, 3, 1)).reshape(cout, k)
    p = dict(
        w=jnp.pad(wt, ((0, npad - cout), (0, 0))).astype(jnp.bfloat16),
        b=jnp.pad(b, (0, npad - cout)).reshape(npad, 1).astype(jnp.float32),
    )
    if gamma is not None:
        p["gamma"] = jnp.pad(gamma, (0, npad - cout)).reshape(npad, 1).astype(jnp.float32)
        p["beta"] = jnp.pad(beta, (0, npad - cout)).reshape(npad, 1).astype(jnp.float32)
    return p


def init_raw_params(key):
    def conv_init(k, cin, cout):
        k1, k2 = jax.random.split(k)
        s = 1.0 / float((cin * 16) ** 0.5)
        return dict(w=jax.random.uniform(k1, (cout, cin, 4, 4), jnp.float32, -s, s),
                    b=jax.random.uniform(k2, (cout,), jnp.float32, -s, s))

    ks = jax.random.split(key, 5)
    raw = dict(c1=conv_init(ks[0], 2, 8), c2=conv_init(ks[1], 8, 16),
               c3=conv_init(ks[2], 16, 32), c4=conv_init(ks[3], 32, 64),
               c5=conv_init(ks[4], 64, 1))
    for name, c in (("c2", 16), ("c3", 32), ("c4", 64)):
        raw[name]["gamma"] = jnp.ones((c,), jnp.float32)
        raw[name]["beta"] = jnp.zeros((c,), jnp.float32)
    return raw


def prepare_params(raw):
    return {name: _prep_conv(lp["w"], lp["b"], lp.get("gamma"), lp.get("beta"))
            for name, lp in raw.items()}


# ----------------------------------------------------------------------------
# Pure-JAX f32 reference (PyTorch semantics) for self-validation
# ----------------------------------------------------------------------------

def reference_forward(x_nchw, raw):
    def conv(x, w, b, stride):
        y = jax.lax.conv_general_dilated(
            x, w, window_strides=(stride, stride), padding=((1, 1), (1, 1)),
            dimension_numbers=("NCHW", "OIHW", "NCHW"))
        return y + b.reshape(1, -1, 1, 1)

    def bn(x, g, be):
        mean = jnp.mean(x, axis=(0, 2, 3), keepdims=True)
        var = jnp.mean((x - mean) ** 2, axis=(0, 2, 3), keepdims=True)
        return ((x - mean) * jax.lax.rsqrt(var + BN_EPS) * g.reshape(1, -1, 1, 1)
                + be.reshape(1, -1, 1, 1))

    leaky = lambda v: jnp.where(v >= 0, v, LEAKY_SLOPE * v)

    h = leaky(conv(x_nchw, raw["c1"]["w"], raw["c1"]["b"], 2))
    h = leaky(bn(conv(h, raw["c2"]["w"], raw["c2"]["b"], 2),
                 raw["c2"]["gamma"], raw["c2"]["beta"]))
    h = leaky(bn(conv(h, raw["c3"]["w"], raw["c3"]["b"], 2),
                 raw["c3"]["gamma"], raw["c3"]["beta"]))
    h = leaky(bn(conv(h, raw["c4"]["w"], raw["c4"]["b"], 1),
                 raw["c4"]["gamma"], raw["c4"]["beta"]))
    h = conv(h, raw["c5"]["w"], raw["c5"]["b"], 1)
    return jax.nn.sigmoid(h)


if __name__ == "__main__":
    key = jax.random.PRNGKey(0)
    pkey, xkey, xkey2 = jax.random.split(key, 3)
    raw = init_raw_params(pkey)
    params = prepare_params(raw)       # hoisted weight transforms (done once)

    fwd = jax.jit(discriminator_forward)
    ref = jax.jit(reference_forward)

    # Small input: batch=2, 2 channels, 32x32 spatial (smallest clean size for three
    # stride-2 k4 convs + two stride-1 k4 convs -> 2x2 output map).  Exercises the fully
    # fused conv+BN+LeakyReLU path (gm == 1 everywhere).
    x = jax.random.uniform(xkey, (2, 2, 32, 32), jnp.float32)
    out = jax.block_until_ready(fwd(x, params))
    assert out.shape == (2, 1, 2, 2), out.shape
    assert bool(jnp.all(jnp.isfinite(out)))
    assert bool(jnp.all((out >= 0) & (out <= 1)))
    err = float(jnp.max(jnp.abs(out - ref(x, raw))))
    assert err < 0.1, f"mismatch vs f32 reference: {err}"

    # Larger input exercises the multi-M-block paths: layer 1 runs with gm=7 ("parallel"
    # non-BN blocks) and layer 2 takes the partial-stats BN path (gm=2, M axis parallel,
    # bf16 intermediate + second-pass normalize kernel), plus masked fused-BN tiles.
    x2 = jax.random.uniform(xkey2, (2, 2, 160, 160), jnp.float32)
    out2 = jax.block_until_ready(fwd(x2, params))
    assert out2.shape == (2, 1, 18, 18), out2.shape
    assert bool(jnp.all(jnp.isfinite(out2)))
    assert bool(jnp.all((out2 >= 0) & (out2 <= 1)))
    err2 = float(jnp.max(jnp.abs(out2 - ref(x2, raw))))
    assert err2 < 0.1, f"mismatch vs f32 reference: {err2}"

    print("KERNEL_OK")
</pallas_src>

<mosaic_0001>
module attributes {stable_mosaic.version = 11 : i64} {
  func.func @kernel(%arg0: i32, %arg1: memref<32x512xbf16, #tpu.memory_space<vmem>>, %arg2: memref<16x32xbf16, #tpu.memory_space<vmem>>, %arg3: memref<16x1xf32, #tpu.memory_space<vmem>>, %arg4: memref<16x512xbf16, #tpu.memory_space<vmem>>) attributes {dimension_semantics = [#tpu.dimension_semantics<parallel>], iteration_bounds = array<i64: 1>, scalar_prefetch = 0 : i64, scratch_operands = 0 : i64, tpu.core_type = #tpu.core_type<tc>, window_params = [{transform_indices = @transform_0, window_bounds = array<i64: 32, 512>}, {pipeline_mode = #tpu.pipeline_mode<synchronous>, transform_indices = @transform_1, window_bounds = array<i64: 16, 32>}, {pipeline_mode = #tpu.pipeline_mode<synchronous>, transform_indices = @transform_2, window_bounds = array<i64: 16, 1>}, {transform_indices = @transform_3, window_bounds = array<i64: 16, 512>}]} {
    %c0 = arith.constant 0 : index
    %c0_0 = arith.constant 0 : index
    %0 = vector.load %arg2[%c0, %c0_0] : memref<16x32xbf16, #tpu.memory_space<vmem>>, vector<16x32xbf16>
    %c0_1 = arith.constant 0 : index
    %c0_2 = arith.constant 0 : index
    %1 = vector.load %arg1[%c0_1, %c0_2] : memref<32x512xbf16, #tpu.memory_space<vmem>>, vector<32x512xbf16>
    %cst = arith.constant dense<0.000000e+00> : vector<16x512xf32>
    %2 = tpu.matmul %0, %1, %cst {dimension_numbers = #tpu.dot_dimension_numbers<[1], [0], [0], [1], [0, 0, 1, 1], [], []>} : vector<16x32xbf16>, vector<32x512xbf16>, vector<16x512xf32> -> vector<16x512xf32>
    %c0_3 = arith.constant 0 : index
    %c0_4 = arith.constant 0 : index
    %3 = vector.load %arg3[%c0_3, %c0_4] : memref<16x1xf32, #tpu.memory_space<vmem>>, vector<16x1xf32>
    %4 = vector.broadcast %3 : vector<16x1xf32> to vector<16x512xf32>
    %5 = arith.addf %2, %4 : vector<16x512xf32>
    %cst_5 = arith.constant 0.000000e+00 : f32
    %6 = vector.broadcast %cst_5 : f32 to vector<16x512xf32>
    %7 = arith.cmpf oge, %5, %6 : vector<16x512xf32>
    %cst_6 = arith.constant 2.000000e-01 : f32
    %8 = vector.broadcast %cst_6 : f32 to vector<16x512xf32>
    %9 = arith.mulf %8, %5 : vector<16x512xf32>
    %10 = arith.select %7, %5, %9 : vector<16x512xi1>, vector<16x512xf32>
    %11 = arith.truncf %10 : vector<16x512xf32> to vector<16x512xbf16>
    %c0_7 = arith.constant 0 : index
    %c0_8 = arith.constant 0 : index
    %12 = vector.load %arg4[%c0_7, %c0_8] : memref<16x512xbf16, #tpu.memory_space<vmem>>, vector<16x512xbf16>
    tpu.vector_store %arg4[%c0_7, %c0_8], %11 {strides = array<i32>} : memref<16x512xbf16, #tpu.memory_space<vmem>>, vector<16x512xbf16>,
    return
  }
  func.func @transform_0(%arg0: i32) -> (i32, i32) {
    %c0_i32 = arith.constant 0 : i32
    %c0_i32_0 = arith.constant 0 : i32
    return %c0_i32, %arg0 : i32, i32
  }
  func.func @transform_1(%arg0: i32) -> (i32, i32) {
    %c0_i32 = arith.constant 0 : i32
    %c0_i32_0 = arith.constant 0 : i32
    %c0_i32_1 = arith.constant 0 : i32
    return %c0_i32, %c0_i32_0 : i32, i32
  }
  func.func @transform_2(%arg0: i32) -> (i32, i32) {
    %c0_i32 = arith.constant 0 : i32
    %c0_i32_0 = arith.constant 0 : i32
    %c0_i32_1 = arith.constant 0 : i32
    return %c0_i32, %c0_i32_0 : i32, i32
  }
  func.func @transform_3(%arg0: i32) -> (i32, i32) {
    %c0_i32 = arith.constant 0 : i32
    %c0_i32_0 = arith.constant 0 : i32
    return %c0_i32, %arg0 : i32, i32
  }
}

module attributes {stable_mosaic.version = 11 : i64} {
  func.func @kernel(%arg0: i32, %arg1: memref<128x128xbf16, #tpu.memory_space<vmem>>, %arg2: memref<16x128xbf16, #tpu.memory_space<vmem>>, %arg3: memref<16x1xf32, #tpu.memory_space<vmem>>, %arg4: memref<16x1xf32, #tpu.memory_space<vmem>>, %arg5: memref<16x128xbf16, #tpu.memory_space<vmem>>) attributes {dimension_semantics = [#tpu.dimension_semantics<parallel>], iteration_bounds = array<i64: 1>, scalar_prefetch = 0 : i64, scratch_operands = 0 : i64, tpu.core_type = #tpu.core_type<tc>, window_params = [{transform_indices = @transform_0, window_bounds = array<i64: 128, 128>}, {pipeline_mode = #tpu.pipeline_mode<synchronous>, transform_indices = @transform_1, window_bounds = array<i64: 16, 128>}, {pipeline_mode = #tpu.pipeline_mode<synchronous>, transform_indices = @transform_2, window_bounds = array<i64: 16, 1>}, {pipeline_mode = #tpu.pipeline_mode<synchronous>, transform_indices = @transform_3, window_bounds = array<i64: 16, 1>}, {transform_indices = @transform_4, window_bounds = array<i64: 16, 128>}]} {
    %c0 = arith.constant 0 : index
    %c0_0 = arith.constant 0 : index
    %0 = vector.load %arg2[%c0, %c0_0] : memref<16x128xbf16, #tpu.memory_space<vmem>>, vector<16x128xbf16>
    %c0_1 = arith.constant 0 : index
    %c0_2 = arith.constant 0 : index
    %1 = vector.load %arg1[%c0_1, %c0_2] : memref<128x128xbf16, #tpu.memory_space<vmem>>, vector<128x128xbf16>
    %cst = arith.constant dense<0.000000e+00> : vector<16x128xf32>
    %2 = tpu.matmul %0, %1, %cst {dimension_numbers = #tpu.dot_dimension_numbers<[1], [0], [0], [1], [0, 0, 1, 1], [], []>} : vector<16x128xbf16>, vector<128x128xbf16>, vector<16x128xf32> -> vector<16x128xf32>
    %cst_3 = arith.constant dense<0.000000e+00> : vector<16xf32>
    %3 = vector.multi_reduction <add>, %2, %cst_3 [1] : vector<16x128xf32> to vector<16xf32>
    %4 = vector.shape_cast %3 : vector<16xf32> to vector<16x1xf32>
    %cst_4 = arith.constant 7.812500e-03 : f32
    %5 = vector.broadcast %cst_4 : f32 to vector<16x1xf32>
    %6 = arith.mulf %4, %5 : vector<16x1xf32>
    %7 = arith.mulf %2, %2 : vector<16x128xf32>
    %cst_5 = arith.constant dense<0.000000e+00> : vector<16xf32>
    %8 = vector.multi_reduction <add>, %7, %cst_5 [1] : vector<16x128xf32> to vector<16xf32>
    %9 = vector.shape_cast %8 : vector<16xf32> to vector<16x1xf32>
    %cst_6 = arith.constant 7.812500e-03 : f32
    %10 = vector.broadcast %cst_6 : f32 to vector<16x1xf32>
    %11 = arith.mulf %9, %10 : vector<16x1xf32>
    %12 = arith.mulf %6, %6 : vector<16x1xf32>
    %13 = arith.subf %11, %12 : vector<16x1xf32>
    %cst_7 = arith.constant 0.000000e+00 : f32
    %14 = vector.broadcast %cst_7 : f32 to vector<16x1xf32>
    %15 = arith.maximumf %13, %14 : vector<16x1xf32>
    %c0_8 = arith.constant 0 : index
    %c0_9 = arith.constant 0 : index
    %16 = vector.load %arg3[%c0_8, %c0_9] : memref<16x1xf32, #tpu.memory_space<vmem>>, vector<16x1xf32>
    %cst_10 = arith.constant 9.99999974E-6 : f32
    %17 = vector.broadcast %cst_10 : f32 to vector<16x1xf32>
    %18 = arith.addf %15, %17 : vector<16x1xf32>
    %19 = math.rsqrt %18 : vector<16x1xf32>
    %20 = arith.mulf %16, %19 : vector<16x1xf32>
    %21 = vector.broadcast %6 : vector<16x1xf32> to vector<16x128xf32>
    %22 = arith.subf %2, %21 : vector<16x128xf32>
    %23 = vector.broadcast %20 : vector<16x1xf32> to vector<16x128xf32>
    %24 = arith.mulf %22, %23 : vector<16x128xf32>
    %c0_11 = arith.constant 0 : index
    %c0_12 = arith.constant 0 : index
    %25 = vector.load %arg4[%c0_11, %c0_12] : memref<16x1xf32, #tpu.memory_space<vmem>>, vector<16x1xf32>
    %26 = vector.broadcast %25 : vector<16x1xf32> to vector<16x128xf32>
    %27 = arith.addf %24, %26 : vector<16x128xf32>
    %cst_13 = arith.constant 0.000000e+00 : f32
    %28 = vector.broadcast %cst_13 : f32 to vector<16x128xf32>
    %29 = arith.cmpf oge, %27, %28 : vector<16x128xf32>
    %cst_14 = arith.constant 2.000000e-01 : f32
    %30 = vector.broadcast %cst_14 : f32 to vector<16x128xf32>
    %31 = arith.mulf %30, %27 : vector<16x128xf32>
    %32 = arith.select %29, %27, %31 : vector<16x128xi1>, vector<16x128xf32>
    %33 = arith.truncf %32 : vector<16x128xf32> to vector<16x128xbf16>
    %c0_15 = arith.constant 0 : index
    %c0_16 = arith.constant 0 : index
    %34 = vector.load %arg5[%c0_15, %c0_16] : memref<16x128xbf16, #tpu.memory_space<vmem>>, vector<16x128xbf16>
    tpu.vector_store %arg5[%c0_15, %c0_16], %33 {strides = array<i32>} : memref<16x128xbf16, #tpu.memory_space<vmem>>, vector<16x128xbf16>,
    return
  }
  func.func @transform_0(%arg0: i32) -> (i32, i32) {
    %c0_i32 = arith.constant 0 : i32
    %c0_i32_0 = arith.constant 0 : i32
    return %c0_i32, %arg0 : i32, i32
  }
  func.func @transform_1(%arg0: i32) -> (i32, i32) {
    %c0_i32 = arith.constant 0 : i32
    %c0_i32_0 = arith.constant 0 : i32
    %c0_i32_1 = arith.constant 0 : i32
    return %c0_i32, %c0_i32_0 : i32, i32
  }
  func.func @transform_2(%arg0: i32) -> (i32, i32) {
    %c0_i32 = arith.constant 0 : i32
    %c0_i32_0 = arith.constant 0 : i32
    %c0_i32_1 = arith.constant 0 : i32
    return %c0_i32, %c0_i32_0 : i32, i32
  }
  func.func @transform_3(%arg0: i32) -> (i32, i32) {
    %c0_i32 = arith.constant 0 : i32
    %c0_i32_0 = arith.constant 0 : i32
    %c0_i32_1 = arith.constant 0 : i32
    return %c0_i32, %c0_i32_0 : i32, i32
  }
  func.func @transform_4(%arg0: i32) -> (i32, i32) {
    %c0_i32 = arith.constant 0 : i32
    %c0_i32_0 = arith.constant 0 : i32
    return %c0_i32, %arg0 : i32, i32
  }
}

module attributes {stable_mosaic.version = 11 : i64} {
  func.func @kernel(%arg0: i32, %arg1: memref<256x128xbf16, #tpu.memory_space<vmem>>, %arg2: memref<32x256xbf16, #tpu.memory_space<vmem>>, %arg3: memref<32x1xf32, #tpu.memory_space<vmem>>, %arg4: memref<32x1xf32, #tpu.memory_space<vmem>>, %arg5: memref<32x128xbf16, #tpu.memory_space<vmem>>) attributes {dimension_semantics = [#tpu.dimension_semantics<parallel>], iteration_bounds = array<i64: 1>, scalar_prefetch = 0 : i64, scratch_operands = 0 : i64, tpu.core_type = #tpu.core_type<tc>, window_params = [{transform_indices = @transform_0, window_bounds = array<i64: 256, 128>}, {pipeline_mode = #tpu.pipeline_mode<synchronous>, transform_indices = @transform_1, window_bounds = array<i64: 32, 256>}, {pipeline_mode = #tpu.pipeline_mode<synchronous>, transform_indices = @transform_2, window_bounds = array<i64: 32, 1>}, {pipeline_mode = #tpu.pipeline_mode<synchronous>, transform_indices = @transform_3, window_bounds = array<i64: 32, 1>}, {transform_indices = @transform_4, window_bounds = array<i64: 32, 128>}]} {
    %c0 = arith.constant 0 : index
    %c0_0 = arith.constant 0 : index
    %0 = vector.load %arg2[%c0, %c0_0] : memref<32x256xbf16, #tpu.memory_space<vmem>>, vector<32x256xbf16>
    %c0_1 = arith.constant 0 : index
    %c0_2 = arith.constant 0 : index
    %1 = vector.load %arg1[%c0_1, %c0_2] : memref<256x128xbf16, #tpu.memory_space<vmem>>, vector<256x128xbf16>
    %cst = arith.constant dense<0.000000e+00> : vector<32x128xf32>
    %2 = tpu.matmul %0, %1, %cst {dimension_numbers = #tpu.dot_dimension_numbers<[1], [0], [0], [1], [0, 0, 1, 1], [], []>} : vector<32x256xbf16>, vector<256x128xbf16>, vector<32x128xf32> -> vector<32x128xf32>
    %3 = tpu.iota {dimensions = array<i32: 1>} : vector<32x128xi32>
    %c32_i32 = arith.constant 32 : i32
    %4 = vector.broadcast %c32_i32 : i32 to vector<32x128xi32>
    %5 = arith.cmpi slt, %3, %4 : vector<32x128xi32>
    %cst_3 = arith.constant 0.000000e+00 : f32
    %6 = vector.broadcast %cst_3 : f32 to vector<32x128xf32>
    %7 = arith.select %5, %2, %6 : vector<32x128xi1>, vector<32x128xf32>
    %cst_4 = arith.constant dense<0.000000e+00> : vector<32xf32>
    %8 = vector.multi_reduction <add>, %7, %cst_4 [1] : vector<32x128xf32> to vector<32xf32>
    %9 = vector.shape_cast %8 : vector<32xf32> to vector<32x1xf32>
    %cst_5 = arith.constant 3.125000e-02 : f32
    %10 = vector.broadcast %cst_5 : f32 to vector<32x1xf32>
    %11 = arith.mulf %9, %10 : vector<32x1xf32>
    %12 = arith.mulf %7, %7 : vector<32x128xf32>
    %cst_6 = arith.constant dense<0.000000e+00> : vector<32xf32>
    %13 = vector.multi_reduction <add>, %12, %cst_6 [1] : vector<32x128xf32> to vector<32xf32>
    %14 = vector.shape_cast %13 : vector<32xf32> to vector<32x1xf32>
    %cst_7 = arith.constant 3.125000e-02 : f32
    %15 = vector.broadcast %cst_7 : f32 to vector<32x1xf32>
    %16 = arith.mulf %14, %15 : vector<32x1xf32>
    %17 = arith.mulf %11, %11 : vector<32x1xf32>
    %18 = arith.subf %16, %17 : vector<32x1xf32>
    %cst_8 = arith.constant 0.000000e+00 : f32
    %19 = vector.broadcast %cst_8 : f32 to vector<32x1xf32>
    %20 = arith.maximumf %18, %19 : vector<32x1xf32>
    %c0_9 = arith.constant 0 : index
    %c0_10 = arith.constant 0 : index
    %21 = vector.load %arg3[%c0_9, %c0_10] : memref<32x1xf32, #tpu.memory_space<vmem>>, vector<32x1xf32>
    %cst_11 = arith.constant 9.99999974E-6 : f32
    %22 = vector.broadcast %cst_11 : f32 to vector<32x1xf32>
    %23 = arith.addf %20, %22 : vector<32x1xf32>
    %24 = math.rsqrt %23 : vector<32x1xf32>
    %25 = arith.mulf %21, %24 : vector<32x1xf32>
    %26 = vector.broadcast %11 : vector<32x1xf32> to vector<32x128xf32>
    %27 = arith.subf %2, %26 : vector<32x128xf32>
    %28 = vector.broadcast %25 : vector<32x1xf32> to vector<32x128xf32>
    %29 = arith.mulf %27, %28 : vector<32x128xf32>
    %c0_12 = arith.constant 0 : index
    %c0_13 = arith.constant 0 : index
    %30 = vector.load %arg4[%c0_12, %c0_13] : memref<32x1xf32, #tpu.memory_space<vmem>>, vector<32x1xf32>
    %31 = vector.broadcast %30 : vector<32x1xf32> to vector<32x128xf32>
    %32 = arith.addf %29, %31 : vector<32x128xf32>
    %cst_14 = arith.constant 0.000000e+00 : f32
    %33 = vector.broadcast %cst_14 : f32 to vector<32x128xf32>
    %34 = arith.cmpf oge, %32, %33 : vector<32x128xf32>
    %cst_15 = arith.constant 2.000000e-01 : f32
    %35 = vector.broadcast %cst_15 : f32 to vector<32x128xf32>
    %36 = arith.mulf %35, %32 : vector<32x128xf32>
    %37 = arith.select %34, %32, %36 : vector<32x128xi1>, vector<32x128xf32>
    %38 = arith.truncf %37 : vector<32x128xf32> to vector<32x128xbf16>
    %c0_16 = arith.constant 0 : index
    %c0_17 = arith.constant 0 : index
    %39 = vector.load %arg5[%c0_16, %c0_17] : memref<32x128xbf16, #tpu.memory_space<vmem>>, vector<32x128xbf16>
    tpu.vector_store %arg5[%c0_16, %c0_17], %38 {strides = array<i32>} : memref<32x128xbf16, #tpu.memory_space<vmem>>, vector<32x128xbf16>,
    return
  }
  func.func @transform_0(%arg0: i32) -> (i32, i32) {
    %c0_i32 = arith.constant 0 : i32
    %c0_i32_0 = arith.constant 0 : i32
    return %c0_i32, %arg0 : i32, i32
  }
  func.func @transform_1(%arg0: i32) -> (i32, i32) {
    %c0_i32 = arith.constant 0 : i32
    %c0_i32_0 = arith.constant 0 : i32
    %c0_i32_1 = arith.constant 0 : i32
    return %c0_i32, %c0_i32_0 : i32, i32
  }
  func.func @transform_2(%arg0: i32) -> (i32, i32) {
    %c0_i32 = arith.constant 0 : i32
    %c0_i32_0 = arith.constant 0 : i32
    %c0_i32_1 = arith.constant 0 : i32
    return %c0_i32, %c0_i32_0 : i32, i32
  }
  func.func @transform_3(%arg0: i32) -> (i32, i32) {
    %c0_i32 = arith.constant 0 : i32
    %c0_i32_0 = arith.constant 0 : i32
    %c0_i32_1 = arith.constant 0 : i32
    return %c0_i32, %c0_i32_0 : i32, i32
  }
  func.func @transform_4(%arg0: i32) -> (i32, i32) {
    %c0_i32 = arith.constant 0 : i32
    %c0_i32_0 = arith.constant 0 : i32
    return %c0_i32, %arg0 : i32, i32
  }
}

module attributes {stable_mosaic.version = 11 : i64} {
  func.func @kernel(%arg0: i32, %arg1: memref<512x128xbf16, #tpu.memory_space<vmem>>, %arg2: memref<64x512xbf16, #tpu.memory_space<vmem>>, %arg3: memref<64x1xf32, #tpu.memory_space<vmem>>, %arg4: memref<64x1xf32, #tpu.memory_space<vmem>>, %arg5: memref<64x128xbf16, #tpu.memory_space<vmem>>) attributes {dimension_semantics = [#tpu.dimension_semantics<parallel>], iteration_bounds = array<i64: 1>, scalar_prefetch = 0 : i64, scratch_operands = 0 : i64, tpu.core_type = #tpu.core_type<tc>, window_params = [{transform_indices = @transform_0, window_bounds = array<i64: 512, 128>}, {pipeline_mode = #tpu.pipeline_mode<synchronous>, transform_indices = @transform_1, window_bounds = array<i64: 64, 512>}, {pipeline_mode = #tpu.pipeline_mode<synchronous>, transform_indices = @transform_2, window_bounds = array<i64: 64, 1>}, {pipeline_mode = #tpu.pipeline_mode<synchronous>, transform_indices = @transform_3, window_bounds = array<i64: 64, 1>}, {transform_indices = @transform_4, window_bounds = array<i64: 64, 128>}]} {
    %c0 = arith.constant 0 : index
    %c0_0 = arith.constant 0 : index
    %0 = vector.load %arg2[%c0, %c0_0] : memref<64x512xbf16, #tpu.memory_space<vmem>>, vector<64x512xbf16>
    %c0_1 = arith.constant 0 : index
    %c0_2 = arith.constant 0 : index
    %1 = vector.load %arg1[%c0_1, %c0_2] : memref<512x128xbf16, #tpu.memory_space<vmem>>, vector<512x128xbf16>
    %cst = arith.constant dense<0.000000e+00> : vector<64x128xf32>
    %2 = tpu.matmul %0, %1, %cst {dimension_numbers = #tpu.dot_dimension_numbers<[1], [0], [0], [1], [0, 0, 1, 1], [], []>} : vector<64x512xbf16>, vector<512x128xbf16>, vector<64x128xf32> -> vector<64x128xf32>
    %3 = tpu.iota {dimensions = array<i32: 1>} : vector<64x128xi32>
    %c18_i32 = arith.constant 18 : i32
    %4 = vector.broadcast %c18_i32 : i32 to vector<64x128xi32>
    %5 = arith.cmpi slt, %3, %4 : vector<64x128xi32>
    %cst_3 = arith.constant 0.000000e+00 : f32
    %6 = vector.broadcast %cst_3 : f32 to vector<64x128xf32>
    %7 = arith.select %5, %2, %6 : vector<64x128xi1>, vector<64x128xf32>
    %cst_4 = arith.constant dense<0.000000e+00> : vector<64xf32>
    %8 = vector.multi_reduction <add>, %7, %cst_4 [1] : vector<64x128xf32> to vector<64xf32>
    %9 = vector.shape_cast %8 : vector<64xf32> to vector<64x1xf32>
    %cst_5 = arith.constant 0.055555556 : f32
    %10 = vector.broadcast %cst_5 : f32 to vector<64x1xf32>
    %11 = arith.mulf %9, %10 : vector<64x1xf32>
    %12 = arith.mulf %7, %7 : vector<64x128xf32>
    %cst_6 = arith.constant dense<0.000000e+00> : vector<64xf32>
    %13 = vector.multi_reduction <add>, %12, %cst_6 [1] : vector<64x128xf32> to vector<64xf32>
    %14 = vector.shape_cast %13 : vector<64xf32> to vector<64x1xf32>
    %cst_7 = arith.constant 0.055555556 : f32
    %15 = vector.broadcast %cst_7 : f32 to vector<64x1xf32>
    %16 = arith.mulf %14, %15 : vector<64x1xf32>
    %17 = arith.mulf %11, %11 : vector<64x1xf32>
    %18 = arith.subf %16, %17 : vector<64x1xf32>
    %cst_8 = arith.constant 0.000000e+00 : f32
    %19 = vector.broadcast %cst_8 : f32 to vector<64x1xf32>
    %20 = arith.maximumf %18, %19 : vector<64x1xf32>
    %c0_9 = arith.constant 0 : index
    %c0_10 = arith.constant 0 : index
    %21 = vector.load %arg3[%c0_9, %c0_10] : memref<64x1xf32, #tpu.memory_space<vmem>>, vector<64x1xf32>
    %cst_11 = arith.constant 9.99999974E-6 : f32
    %22 = vector.broadcast %cst_11 : f32 to vector<64x1xf32>
    %23 = arith.addf %20, %22 : vector<64x1xf32>
    %24 = math.rsqrt %23 : vector<64x1xf32>
    %25 = arith.mulf %21, %24 : vector<64x1xf32>
    %26 = vector.broadcast %11 : vector<64x1xf32> to vector<64x128xf32>
    %27 = arith.subf %2, %26 : vector<64x128xf32>
    %28 = vector.broadcast %25 : vector<64x1xf32> to vector<64x128xf32>
    %29 = arith.mulf %27, %28 : vector<64x128xf32>
    %c0_12 = arith.constant 0 : index
    %c0_13 = arith.constant 0 : index
    %30 = vector.load %arg4[%c0_12, %c0_13] : memref<64x1xf32, #tpu.memory_space<vmem>>, vector<64x1xf32>
    %31 = vector.broadcast %30 : vector<64x1xf32> to vector<64x128xf32>
    %32 = arith.addf %29, %31 : vector<64x128xf32>
    %cst_14 = arith.constant 0.000000e+00 : f32
    %33 = vector.broadcast %cst_14 : f32 to vector<64x128xf32>
    %34 = arith.cmpf oge, %32, %33 : vector<64x128xf32>
    %cst_15 = arith.constant 2.000000e-01 : f32
    %35 = vector.broadcast %cst_15 : f32 to vector<64x128xf32>
    %36 = arith.mulf %35, %32 : vector<64x128xf32>
    %37 = arith.select %34, %32, %36 : vector<64x128xi1>, vector<64x128xf32>
    %38 = arith.truncf %37 : vector<64x128xf32> to vector<64x128xbf16>
    %c0_16 = arith.constant 0 : index
    %c0_17 = arith.constant 0 : index
    %39 = vector.load %arg5[%c0_16, %c0_17] : memref<64x128xbf16, #tpu.memory_space<vmem>>, vector<64x128xbf16>
    tpu.vector_store %arg5[%c0_16, %c0_17], %38 {strides = array<i32>} : memref<64x128xbf16, #tpu.memory_space<vmem>>, vector<64x128xbf16>,
    return
  }
  func.func @transform_0(%arg0: i32) -> (i32, i32) {
    %c0_i32 = arith.constant 0 : i32
    %c0_i32_0 = arith.constant 0 : i32
    return %c0_i32, %arg0 : i32, i32
  }
  func.func @transform_1(%arg0: i32) -> (i32, i32) {
    %c0_i32 = arith.constant 0 : i32
    %c0_i32_0 = arith.constant 0 : i32
    %c0_i32_1 = arith.constant 0 : i32
    return %c0_i32, %c0_i32_0 : i32, i32
  }
  func.func @transform_2(%arg0: i32) -> (i32, i32) {
    %c0_i32 = arith.constant 0 : i32
    %c0_i32_0 = arith.constant 0 : i32
    %c0_i32_1 = arith.constant 0 : i32
    return %c0_i32, %c0_i32_0 : i32, i32
  }
  func.func @transform_3(%arg0: i32) -> (i32, i32) {
    %c0_i32 = arith.constant 0 : i32
    %c0_i32_0 = arith.constant 0 : i32
    %c0_i32_1 = arith.constant 0 : i32
    return %c0_i32, %c0_i32_0 : i32, i32
  }
  func.func @transform_4(%arg0: i32) -> (i32, i32) {
    %c0_i32 = arith.constant 0 : i32
    %c0_i32_0 = arith.constant 0 : i32
    return %c0_i32, %arg0 : i32, i32
  }
}

module attributes {stable_mosaic.version = 11 : i64} {
  func.func @kernel(%arg0: i32, %arg1: memref<1024x128xbf16, #tpu.memory_space<vmem>>, %arg2: memref<16x1024xbf16, #tpu.memory_space<vmem>>, %arg3: memref<16x1xf32, #tpu.memory_space<vmem>>, %arg4: memref<16x128xf32, #tpu.memory_space<vmem>>) attributes {dimension_semantics = [#tpu.dimension_semantics<parallel>], iteration_bounds = array<i64: 1>, scalar_prefetch = 0 : i64, scratch_operands = 0 : i64, tpu.core_type = #tpu.core_type<tc>, window_params = [{transform_indices = @transform_0, window_bounds = array<i64: 1024, 128>}, {pipeline_mode = #tpu.pipeline_mode<synchronous>, transform_indices = @transform_1, window_bounds = array<i64: 16, 1024>}, {pipeline_mode = #tpu.pipeline_mode<synchronous>, transform_indices = @transform_2, window_bounds = array<i64: 16, 1>}, {transform_indices = @transform_3, window_bounds = array<i64: 16, 128>}]} {
    %c0 = arith.constant 0 : index
    %c0_0 = arith.constant 0 : index
    %0 = vector.load %arg2[%c0, %c0_0] : memref<16x1024xbf16, #tpu.memory_space<vmem>>, vector<16x1024xbf16>
    %c0_1 = arith.constant 0 : index
    %c0_2 = arith.constant 0 : index
    %1 = vector.load %arg1[%c0_1, %c0_2] : memref<1024x128xbf16, #tpu.memory_space<vmem>>, vector<1024x128xbf16>
    %cst = arith.constant dense<0.000000e+00> : vector<16x128xf32>
    %2 = tpu.matmul %0, %1, %cst {dimension_numbers = #tpu.dot_dimension_numbers<[1], [0], [0], [1], [0, 0, 1, 1], [], []>} : vector<16x1024xbf16>, vector<1024x128xbf16>, vector<16x128xf32> -> vector<16x128xf32>
    %c0_3 = arith.constant 0 : index
    %c0_4 = arith.constant 0 : index
    %3 = vector.load %arg3[%c0_3, %c0_4] : memref<16x1xf32, #tpu.memory_space<vmem>>, vector<16x1xf32>
    %4 = vector.broadcast %3 : vector<16x1xf32> to vector<16x128xf32>
    %5 = arith.addf %2, %4 : vector<16x128xf32>
    %6 = math.absf %5 : vector<16x128xf32>
    %cst_5 = arith.constant 0.000000e+00 : f32
    %7 = vector.broadcast %cst_5 : f32 to vector<16x128xf32>
    %8 = arith.subf %7, %6 : vector<16x128xf32>
    %9 = math.exp %8 : vector<16x128xf32>
    %cst_6 = arith.constant 0.000000e+00 : f32
    %10 = vector.broadcast %cst_6 : f32 to vector<16x128xf32>
    %11 = arith.cmpf oge, %5, %10 : vector<16x128xf32>
    %cst_7 = arith.constant 1.000000e+00 : f32
    %12 = vector.broadcast %cst_7 : f32 to vector<16x128xf32>
    %13 = arith.select %11, %12, %9 : vector<16x128xi1>, vector<16x128xf32>
    %cst_8 = arith.constant 1.000000e+00 : f32
    %14 = vector.broadcast %cst_8 : f32 to vector<16x128xf32>
    %15 = arith.addf %14, %9 : vector<16x128xf32>
    %16 = tpu.reciprocal %15 {approx = true} : vector<16x128xf32> -> vector<16x128xf32>
    %17 = arith.mulf %13, %16 : vector<16x128xf32>
    %c0_9 = arith.constant 0 : index
    %c0_10 = arith.constant 0 : index
    %18 = vector.load %arg4[%c0_9, %c0_10] : memref<16x128xf32, #tpu.memory_space<vmem>>, vector<16x128xf32>
    tpu.vector_store %arg4[%c0_9, %c0_10], %17 {strides = array<i32>} : memref<16x128xf32, #tpu.memory_space<vmem>>, vector<16x128xf32>,
    return
  }
  func.func @transform_0(%arg0: i32) -> (i32, i32) {
    %c0_i32 = arith.constant 0 : i32
    %c0_i32_0 = arith.constant 0 : i32
    return %c0_i32, %arg0 : i32, i32
  }
  func.func @transform_1(%arg0: i32) -> (i32, i32) {
    %c0_i32 = arith.constant 0 : i32
    %c0_i32_0 = arith.constant 0 : i32
    %c0_i32_1 = arith.constant 0 : i32
    return %c0_i32, %c0_i32_0 : i32, i32
  }
  func.func @transform_2(%arg0: i32) -> (i32, i32) {
    %c0_i32 = arith.constant 0 : i32
    %c0_i32_0 = arith.constant 0 : i32
    %c0_i32_1 = arith.constant 0 : i32
    return %c0_i32, %c0_i32_0 : i32, i32
  }
  func.func @transform_3(%arg0: i32) -> (i32, i32) {
    %c0_i32 = arith.constant 0 : i32
    %c0_i32_0 = arith.constant 0 : i32
    return %c0_i32, %arg0 : i32, i32
  }
}

</mosaic_0001>

<llo_original>
// kernel: discriminator_forward.5
$region0: #{discriminator_forward.5}
  #allocation0 [shape = 'u32[]', space=smem, size = 0x4, offset = 0x4, fixed_abs, tag = 'smem constant byte address 0x4 - core index']
  #allocation1 [shape = 'u32[144,128]{1,0:T(1,128)}', space=vmem, size = 0x12000, scoped, tag = 'internal scratch']
  %s0 = inlined_call_operand.vmem [shape: bf16[32,512], index: 0, kind: input, shape index: {}]
  %s1 = inlined_call_operand.vmem [shape: bf16[16,32], index: 1, kind: input, shape index: {}]
  %s2 = inlined_call_operand.vmem [shape: f32[16,1], index: 2, kind: input, shape index: {}]
  %s3 = inlined_call_operand.vmem [shape: bf16[16,512], index: 3, kind: output, shape index: {}]
  %s4 = sld [smem:[#allocation0]]
  $region22: #{discriminator_forward.5} parent=0
    _
  %s6 = ssub.s32 1, %s4
  %s7 = scalar_select 0, %s6, %s4
  // Predicated region
  $region2: #{discriminator_forward.5} parent=0 // pred_check
    _
  $region3: #{discriminator_forward.5} parent=0 // pred_check_branch
    %9 = sbr.rel (0) target = $region5
  $region4: #{discriminator_forward.5} parent=0 // pred_region
    _
  $region5: #{discriminator_forward.5} parent=0 // pred_fallthru
    _
  // Predicated region
  $region6: #{discriminator_forward.5} parent=0 // pred_check
    _
  $region7: #{discriminator_forward.5} parent=0 // pred_check_branch
    %11 = sbr.rel (0) target = $region9
  $region8: #{discriminator_forward.5} parent=0 // pred_region
    _
  $region9: #{discriminator_forward.5} parent=0 // pred_fallthru
    _
  // Predicated region
  $region10: #{discriminator_forward.5} parent=0 // pred_check
    _
  $region11: #{discriminator_forward.5} parent=0 // pred_check_branch
    %13 = sbr.rel (0) target = $region13
  $region12: #{discriminator_forward.5} parent=0 // pred_region
    _
  $region13: #{discriminator_forward.5} parent=0 // pred_fallthru
    _
  %v15 = vld [vmem:[%s1] sm:$0xf]
  %v16 = vld [vmem:[%s1 + $0x4] sm:$0xf]
  %v17 = vld [vmem:[%s0] sm:$0xff]
  %v18 = vld [vmem:[%s0 + $0x8] sm:$0xff]
  %v19 = vld [vmem:[%s0 + $0x10] sm:$0xff]
  %v20 = vld [vmem:[%s0 + $0x18] sm:$0xff]
  %v21 = vld [vmem:[%s0 + $0x20] sm:$0xff]
  %v22 = vld [vmem:[%s0 + $0x28] sm:$0xff]
  %v23 = vld [vmem:[%s0 + $0x30] sm:$0xff]
  %v24 = vld [vmem:[%s0 + $0x38] sm:$0xff]
  %v25 = vld [vmem:[%s2] sm:$0xff]
  %v26 = vld [vmem:[%s2 + $0x8] sm:$0xff]
  %28 = vset.pattern.permute.xlu0 0
  %29 = vperm.xlu0 %28, %v25
  %v30 = vpop.permute.xlu0 %29
  %33 = vset.pattern.permute.xlu0 0
  %34 = vperm.xlu0 %33, %v26
  %v35 = vpop.permute.xlu0 %34
  %v39 = vunpack.c.l.b16 %v15
  %v40 = vunpack.c.l.b16 %v16
  %v41 = vpack.c.b16 %v40, %v39
  %v50 = vunpack.c.l.b16 %v17
  %v51 = vunpack.c.h.b16 %v17
  %v52 = vunpack.c.l.b16 %v18
  %v53 = vunpack.c.h.b16 %v18
  %v54 = vunpack.c.l.b16 %v19
  %v55 = vunpack.c.h.b16 %v19
  %v56 = vunpack.c.l.b16 %v20
  %v57 = vunpack.c.h.b16 %v20
  %v58 = vunpack.c.l.b16 %v21
  %v59 = vunpack.c.h.b16 %v21
  %v60 = vunpack.c.l.b16 %v22
  %v61 = vunpack.c.h.b16 %v22
  %v62 = vunpack.c.l.b16 %v23
  %v63 = vunpack.c.h.b16 %v23
  %v64 = vunpack.c.l.b16 %v24
  %v65 = vunpack.c.h.b16 %v24
  %v66 = vpack.c.b16 %v54, %v50
  %v67 = vpack.c.b16 %v55, %v51
  %v68 = vpack.c.b16 %v56, %v52
  %v69 = vpack.c.b16 %v57, %v53
  %v70 = vpack.c.b16 %v62, %v58
  %v71 = vpack.c.b16 %v63, %v59
  %v72 = vpack.c.b16 %v64, %v60
  %v73 = vpack.c.b16 %v65, %v61
  %vm82 = vcmask 261120
  %v84 = vsel %vm82, %v41, 0
  %86 = vmatprep.subr.bf16.mxu0 %v67
  %87 = vmatpush1.bf16.msra.mxu0 %v66
  %88 = vmatprep.subr.bf16.mxu0 %v71
  %89 = vmatpush1.bf16.msra.mxu0 %v70
  %90 = vmatprep.subr.bf16.mxu0 0
  %91 = vmatpush1.bf16.msra.mxu0 0
  %92 = vmatprep.subr.bf16.mxu0 0
  %93 = vmatpush1.bf16.msra.mxu0 0
  %94 = vmatprep.subr.bf16.mxu0 0
  %95 = vmatpush1.bf16.msra.mxu0 0
  %96 = vmatprep.subr.bf16.mxu0 0
  %97 = vmatpush1.bf16.msra.mxu0 0
  %98 = vmatprep.subr.bf16.mxu0 0
  %99 = vmatpush1.bf16.msra.mxu0 0
  %100 = vmatprep.subr.bf16.mxu0 0
  %101 = vmatpush1.bf16.msra.mxu0 0
  %102 = vmatprep.subr.bf16.mxu0 0
  %103 = vmatpush1.bf16.msra.mxu0 0
  %104 = vmatprep.subr.bf16.mxu0 0
  %105 = vmatpush1.bf16.msra.mxu0 0
  %106 = vmatprep.subr.bf16.mxu0 0
  %107 = vmatpush1.bf16.msra.mxu0 0
  %108 = vmatprep.subr.bf16.mxu0 0
  %109 = vmatpush1.bf16.msra.mxu0 0
  %110 = vmatprep.subr.bf16.mxu0 0
  %111 = vmatpush1.bf16.msra.mxu0 0
  %112 = vmatprep.subr.bf16.mxu0 0
  %113 = vmatpush1.bf16.msra.mxu0 0
  %114 = vmatprep.subr.bf16.mxu0 0
  %115 = vmatpush1.bf16.msra.mxu0 0
  %116 = vmatprep.subr.bf16.mxu0 0
  %117 = vmatpush1.bf16.msra.mxu0 0
  %118 = vmatprep.mubr.bf16.mxu0 0
  %119 = vmatmul.mubr.bf16.gmra.mrb[0].mxu0 %v84
  %v120 = vpop.f32.mrb[0].mxu0
  %v121 = vadd.f32 %v30, %v120
  %v122 = vpop.f32.mrb[0].mxu0
  %v123 = vadd.f32 %v30, %v122
  %v124 = vpop.f32.mrb[0].mxu0
  %v125 = vadd.f32 %v35, %v124
  %v126 = vpop.f32.mrb[0].mxu0
  %v127 = vadd.f32 %v35, %v126
  %128 = vdwg.mxu0
  %129 = vmatprep.subr.bf16.mxu0 %v69
  %130 = vmatpush1.bf16.msra.mxu0 %v68
  %131 = vmatprep.subr.bf16.mxu0 %v73
  %132 = vmatpush1.bf16.msra.mxu0 %v72
  %133 = vmatprep.subr.bf16.mxu0 0
  %134 = vmatpush1.bf16.msra.mxu0 0
  %135 = vmatprep.subr.bf16.mxu0 0
  %136 = vmatpush1.bf16.msra.mxu0 0
  %137 = vmatprep.subr.bf16.mxu0 0
  %138 = vmatpush1.bf16.msra.mxu0 0
  %139 = vmatprep.subr.bf16.mxu0 0
  %140 = vmatpush1.bf16.msra.mxu0 0
  %141 = vmatprep.subr.bf16.mxu0 0
  %142 = vmatpush1.bf16.msra.mxu0 0
  %143 = vmatprep.subr.bf16.mxu0 0
  %144 = vmatpush1.bf16.msra.mxu0 0
  %145 = vmatprep.subr.bf16.mxu0 0
  %146 = vmatpush1.bf16.msra.mxu0 0
  %147 = vmatprep.subr.bf16.mxu0 0
  %148 = vmatpush1.bf16.msra.mxu0 0
  %149 = vmatprep.subr.bf16.mxu0 0
  %150 = vmatpush1.bf16.msra.mxu0 0
  %151 = vmatprep.subr.bf16.mxu0 0
  %152 = vmatpush1.bf16.msra.mxu0 0
  %153 = vmatprep.subr.bf16.mxu0 0
  %154 = vmatpush1.bf16.msra.mxu0 0
  %155 = vmatprep.subr.bf16.mxu0 0
  %156 = vmatpush1.bf16.msra.mxu0 0
  %157 = vmatprep.subr.bf16.mxu0 0
  %158 = vmatpush1.bf16.msra.mxu0 0
  %159 = vmatprep.subr.bf16.mxu0 0
  %160 = vmatpush1.bf16.msra.mxu0 0
  %161 = vmatprep.mubr.bf16.mxu0 0
  %162 = vmatmul.mubr.bf16.gmra.mrb[0].mxu0 %v84
  %v163 = vpop.f32.mrb[0].mxu0
  %v164 = vadd.f32 %v30, %v163
  %v165 = vpop.f32.mrb[0].mxu0
  %v166 = vadd.f32 %v30, %v165
  %v167 = vpop.f32.mrb[0].mxu0
  %v168 = vadd.f32 %v35, %v167
  %v169 = vpop.f32.mrb[0].mxu0
  %v170 = vadd.f32 %v35, %v169
  %171 = vdwg.mxu0
  %vm172 = vcmp.ge.f32.partialorder %v121, 0.0
  %vm173 = vcmp.ge.f32.partialorder %v123, 0.0
  %vm174 = vcmp.ge.f32.partialorder %v164, 0.0
  %vm175 = vcmp.ge.f32.partialorder %v166, 0.0
  %vm176 = vcmp.ge.f32.partialorder %v125, 0.0
  %vm177 = vcmp.ge.f32.partialorder %v127, 0.0
  %vm178 = vcmp.ge.f32.partialorder %v168, 0.0
  %vm179 = vcmp.ge.f32.partialorder %v170, 0.0
  %v180 = vmul.f32 %v121, 0.2
  %v181 = vmul.f32 %v123, 0.2
  %v182 = vmul.f32 %v164, 0.2
  %v183 = vmul.f32 %v166, 0.2
  %v184 = vmul.f32 %v125, 0.2
  %v185 = vmul.f32 %v127, 0.2
  %v186 = vmul.f32 %v168, 0.2
  %v187 = vmul.f32 %v170, 0.2
  %v188 = vsel %vm172, %v121, %v180
  %v189 = vsel %vm173, %v123, %v181
  %v190 = vsel %vm174, %v164, %v182
  %v191 = vsel %vm175, %v166, %v183
  %v192 = vsel %vm176, %v125, %v184
  %v193 = vsel %vm177, %v127, %v185
  %v194 = vsel %vm178, %v168, %v186
  %v195 = vsel %vm179, %v170, %v187
  %v196 = vpack.c.bf16 %v192, %v188
  %v197 = vpack.c.bf16 %v193, %v189
  %v198 = vpack.c.bf16 %v194, %v190
  %v199 = vpack.c.bf16 %v195, %v191
  %v204 = vunpack.c.l.b16 %v196
  %v205 = vunpack.c.l.b16 %v197
  %v206 = vunpack.c.l.b16 %v198
  %v207 = vunpack.c.l.b16 %v199
  %v208 = vunpack.c.h.b16 %v196
  %v209 = vunpack.c.h.b16 %v197
  %v210 = vunpack.c.h.b16 %v198
  %v211 = vunpack.c.h.b16 %v199
  %v212 = vpack.c.b16 %v205, %v204
  %v213 = vpack.c.b16 %v207, %v206
  %v214 = vpack.c.b16 %v209, %v208
  %v215 = vpack.c.b16 %v211, %v210
  %220 = vst [vmem:[%s3] sm:$0xff] %v212
  %221 = vst [vmem:[%s3 + $0x8] sm:$0xff] %v213
  %222 = vst [vmem:[%s3 + $0x10] sm:$0xff] %v214
  %223 = vst [vmem:[%s3 + $0x18] sm:$0xff] %v215
  // Predicated region
  $region14: #{discriminator_forward.5} parent=0 // pred_check
    _
  $region15: #{discriminator_forward.5} parent=0 // pred_check_branch
    %225 = sbr.rel (0) target = $region17
  $region16: #{discriminator_forward.5} parent=0 // pred_region
    _
  $region17: #{discriminator_forward.5} parent=0 // pred_fallthru
    _
  // Predicated region
  $region18: #{discriminator_forward.5} parent=0 // pred_check
    _
  $region19: #{discriminator_forward.5} parent=0 // pred_check_branch
    %227 = sbr.rel (0) target = $region21
  $region20: #{discriminator_forward.5} parent=0 // pred_region
    _
  $region21: #{discriminator_forward.5} parent=0 // pred_fallthru
    _

// kernel: discriminator_forward.6
$region0: #{discriminator_forward.6}
  #allocation0 [shape = 'u32[]', space=smem, size = 0x4, offset = 0x4, fixed_abs, tag = 'smem constant byte address 0x4 - core index']
  #allocation1 [shape = 'u32[144,128]{1,0:T(1,128)}', space=vmem, size = 0x12000, scoped, tag = 'internal scratch']
  %s0 = inlined_call_operand.vmem [shape: bf16[128,128], index: 0, kind: input, shape index: {}]
  %s1 = inlined_call_operand.vmem [shape: bf16[16,128], index: 1, kind: input, shape index: {}]
  %s2 = inlined_call_operand.vmem [shape: f32[16,1], index: 2, kind: input, shape index: {}]
  %s3 = inlined_call_operand.vmem [shape: f32[16,1], index: 3, kind: input, shape index: {}]
  %s4 = inlined_call_operand.vmem [shape: bf16[16,128], index: 4, kind: output, shape index: {}]
  %s5 = sld [smem:[#allocation0]]
  $region26: #{discriminator_forward.6} parent=0
    _
  %s7 = ssub.s32 1, %s5
  %s8 = scalar_select 0, %s7, %s5
  // Predicated region
  $region2: #{discriminator_forward.6} parent=0 // pred_check
    _
  $region3: #{discriminator_forward.6} parent=0 // pred_check_branch
    %10 = sbr.rel (0) target = $region5
  $region4: #{discriminator_forward.6} parent=0 // pred_region
    _
  $region5: #{discriminator_forward.6} parent=0 // pred_fallthru
    _
  // Predicated region
  $region6: #{discriminator_forward.6} parent=0 // pred_check
    _
  $region7: #{discriminator_forward.6} parent=0 // pred_check_branch
    %12 = sbr.rel (0) target = $region9
  $region8: #{discriminator_forward.6} parent=0 // pred_region
    _
  $region9: #{discriminator_forward.6} parent=0 // pred_fallthru
    _
  // Predicated region
  $region10: #{discriminator_forward.6} parent=0 // pred_check
    _
  $region11: #{discriminator_forward.6} parent=0 // pred_check_branch
    %14 = sbr.rel (0) target = $region13
  $region12: #{discriminator_forward.6} parent=0 // pred_region
    _
  $region13: #{discriminator_forward.6} parent=0 // pred_fallthru
    _
  // Predicated region
  $region14: #{discriminator_forward.6} parent=0 // pred_check
    _
  $region15: #{discriminator_forward.6} parent=0 // pred_check_branch
    %16 = sbr.rel (0) target = $region17
  $region16: #{discriminator_forward.6} parent=0 // pred_region
    _
  $region17: #{discriminator_forward.6} parent=0 // pred_fallthru
    _
  %v18 = vld [vmem:[%s1] sm:$0xf]
  %v19 = vld [vmem:[%s1 + $0x4] sm:$0xf]
  %v20 = vld [vmem:[%s0] sm:$0xf]
  %v21 = vld [vmem:[%s0 + $0x4] sm:$0xf]
  %v22 = vld [vmem:[%s0 + $0x8] sm:$0xf]
  %v23 = vld [vmem:[%s0 + $0xc] sm:$0xf]
  %v24 = vld [vmem:[%s0 + $0x10] sm:$0xf]
  %v25 = vld [vmem:[%s0 + $0x14] sm:$0xf]
  %v26 = vld [vmem:[%s0 + $0x18] sm:$0xf]
  %v27 = vld [vmem:[%s0 + $0x1c] sm:$0xf]
  %v28 = vld [vmem:[%s0 + $0x20] sm:$0xf]
  %v29 = vld [vmem:[%s0 + $0x24] sm:$0xf]
  %v30 = vld [vmem:[%s0 + $0x28] sm:$0xf]
  %v31 = vld [vmem:[%s0 + $0x2c] sm:$0xf]
  %v32 = vld [vmem:[%s0 + $0x30] sm:$0xf]
  %v33 = vld [vmem:[%s0 + $0x34] sm:$0xf]
  %v34 = vld [vmem:[%s0 + $0x38] sm:$0xf]
  %v35 = vld [vmem:[%s0 + $0x3c] sm:$0xf]
  %v38 = vunpack.c.l.b16 %v18
  %v39 = vunpack.c.l.b16 %v19
  %v40 = vpack.c.b16 %v39, %v38
  %v58 = vunpack.c.l.b16 %v20
  %v59 = vunpack.c.l.b16 %v21
  %v60 = vunpack.c.l.b16 %v22
  %v61 = vunpack.c.l.b16 %v23
  %v62 = vunpack.c.l.b16 %v24
  %v63 = vunpack.c.l.b16 %v25
  %v64 = vunpack.c.l.b16 %v26
  %v65 = vunpack.c.l.b16 %v27
  %v66 = vunpack.c.l.b16 %v28
  %v67 = vunpack.c.l.b16 %v29
  %v68 = vunpack.c.l.b16 %v30
  %v69 = vunpack.c.l.b16 %v31
  %v70 = vunpack.c.l.b16 %v32
  %v71 = vunpack.c.l.b16 %v33
  %v72 = vunpack.c.l.b16 %v34
  %v73 = vunpack.c.l.b16 %v35
  %v74 = vpack.c.b16 %v59, %v58
  %v75 = vpack.c.b16 %v61, %v60
  %v76 = vpack.c.b16 %v63, %v62
  %v77 = vpack.c.b16 %v65, %v64
  %v78 = vpack.c.b16 %v67, %v66
  %v79 = vpack.c.b16 %v69, %v68
  %v80 = vpack.c.b16 %v71, %v70
  %v81 = vpack.c.b16 %v73, %v72
  %90 = vmatprep.subr.bf16.mxu0 0
  %91 = vmatpush1.bf16.msra.mxu0 %v74
  %92 = vmatprep.subr.bf16.mxu0 0
  %93 = vmatpush1.bf16.msra.mxu0 %v75
  %94 = vmatprep.subr.bf16.mxu0 0
  %95 = vmatpush1.bf16.msra.mxu0 %v76
  %96 = vmatprep.subr.bf16.mxu0 0
  %97 = vmatpush1.bf16.msra.mxu0 %v77
  %98 = vmatprep.subr.bf16.mxu0 0
  %99 = vmatpush1.bf16.msra.mxu0 %v78
  %100 = vmatprep.subr.bf16.mxu0 0
  %101 = vmatpush1.bf16.msra.mxu0 %v79
  %102 = vmatprep.subr.bf16.mxu0 0
  %103 = vmatpush1.bf16.msra.mxu0 %v80
  %104 = vmatprep.subr.bf16.mxu0 0
  %105 = vmatpush1.bf16.msra.mxu0 %v81
  %106 = vmatprep.subr.bf16.mxu0 0
  %107 = vmatpush1.bf16.msra.mxu0 0
  %108 = vmatprep.subr.bf16.mxu0 0
  %109 = vmatpush1.bf16.msra.mxu0 0
  %110 = vmatprep.subr.bf16.mxu0 0
  %111 = vmatpush1.bf16.msra.mxu0 0
  %112 = vmatprep.subr.bf16.mxu0 0
  %113 = vmatpush1.bf16.msra.mxu0 0
  %114 = vmatprep.subr.bf16.mxu0 0
  %115 = vmatpush1.bf16.msra.mxu0 0
  %116 = vmatprep.subr.bf16.mxu0 0
  %117 = vmatpush1.bf16.msra.mxu0 0
  %118 = vmatprep.subr.bf16.mxu0 0
  %119 = vmatpush1.bf16.msra.mxu0 0
  %120 = vmatprep.subr.bf16.mxu0 0
  %121 = vmatpush1.bf16.msra.mxu0 0
  %122 = vmatprep.mubr.bf16.mxu0 0
  %123 = vmatmul.mubr.bf16.gmra.mrb[0].mxu0 %v40
  %v124 = vpop.f32.mrb[0].mxu0
  %v125 = vadd.f32 0.0, %v124
  %v126 = vpop.f32.mrb[0].mxu0
  %v127 = vpop.f32.mrb[0].mxu0
  %v128 = vadd.f32 0.0, %v127
  %v129 = vpop.f32.mrb[0].mxu0
  %130 = vdwg.mxu0
  %131 = vadd.xlane.f32.xlu0 %v125
  %v132 = vpop.xlane.xlu0 %131
  %133 = vadd.xlane.f32.xlu0 %v128
  %v134 = vpop.xlane.xlu0 %133
  %v135 = vmul.f32 %v132, 0.0078125
  %v136 = vmul.f32 %v134, 0.0078125
  %v137 = vmul.f32 %v125, %v125
  %v138 = vmul.f32 %v128, %v128
  %139 = vadd.xlane.f32.xlu0 %v137
  %v140 = vpop.xlane.xlu0 %139
  %141 = vadd.xlane.f32.xlu0 %v138
  %v142 = vpop.xlane.xlu0 %141
  %v143 = vmul.f32 %v140, 0.0078125
  %v144 = vmul.f32 %v142, 0.0078125
  %v145 = vmul.f32 %v135, %v135
  %v146 = vmul.f32 %v136, %v136
  %v147 = vsub.f32 %v143, %v145
  %v148 = vsub.f32 %v144, %v146
  %v149 = vmax.f32 %v147, 0.0
  %v150 = vmax.f32 %v148, 0.0
  %v151 = vld [vmem:[%s2] sm:$0xff]
  %v152 = vld [vmem:[%s2 + $0x8] sm:$0xff]
  %v153 = vadd.f32 %v149, 1e-05
  %v154 = vadd.f32 %v150, 1e-05
  %v155 = vrsqrt.pop %v153
  %v156 = vrsqrt.pop %v154
  %v157 = vmul.f32 %v151, %v155
  %v158 = vmul.f32 %v152, %v156
  %v159 = vsub.f32 %v125, %v135
  %v160 = vsub.f32 %v128, %v136
  %162 = vset.pattern.permute.xlu0 0
  %163 = vperm.xlu0 %162, %v157
  %v164 = vpop.permute.xlu0 %163
  %167 = vset.pattern.permute.xlu0 0
  %168 = vperm.xlu0 %167, %v158
  %v169 = vpop.permute.xlu0 %168
  %v171 = vmul.f32 %v159, %v164
  %v172 = vmul.f32 %v160, %v169
  %v173 = vld [vmem:[%s3] sm:$0xff]
  %v174 = vld [vmem:[%s3 + $0x8] sm:$0xff]
  %176 = vset.pattern.permute.xlu0 0
  %177 = vperm.xlu0 %176, %v173
  %v178 = vpop.permute.xlu0 %177
  %181 = vset.pattern.permute.xlu0 0
  %182 = vperm.xlu0 %181, %v174
  %v183 = vpop.permute.xlu0 %182
  %v185 = vadd.f32 %v171, %v178
  %v186 = vadd.f32 %v172, %v183
  %vm187 = vcmp.ge.f32.partialorder %v185, 0.0
  %vm188 = vcmp.ge.f32.partialorder %v186, 0.0
  %v189 = vmul.f32 %v185, 0.2
  %v190 = vmul.f32 %v186, 0.2
  %v191 = vsel %vm187, %v185, %v189
  %v192 = vsel %vm188, %v186, %v190
  %v193 = vpack.c.bf16 %v192, %v191
  %v195 = vunpack.c.l.b16 %v193
  %v196 = vunpack.c.h.b16 %v193
  %v197 = vpack.c.b16 %v195, %v195
  %v198 = vpack.c.b16 %v196, %v196
  %201 = vst [vmem:[%s4] sm:$0xf] %v197
  %202 = vst [vmem:[%s4 + $0x4] sm:$0xf] %v198
  // Predicated region
  $region18: #{discriminator_forward.6} parent=0 // pred_check
    _
  $region19: #{discriminator_forward.6} parent=0 // pred_check_branch
    %204 = sbr.rel (0) target = $region21
  $region20: #{discriminator_forward.6} parent=0 // pred_region
    _
  $region21: #{discriminator_forward.6} parent=0 // pred_fallthru
    _
  // Predicated region
  $region22: #{discriminator_forward.6} parent=0 // pred_check
    _
  $region23: #{discriminator_forward.6} parent=0 // pred_check_branch
    %206 = sbr.rel (0) target = $region25
  $region24: #{discriminator_forward.6} parent=0 // pred_region
    _
  $region25: #{discriminator_forward.6} parent=0 // pred_fallthru
    _

// kernel: discriminator_forward.7
$region0: #{discriminator_forward.7}
  #allocation0 [shape = 'u32[]', space=smem, size = 0x4, offset = 0x4, fixed_abs, tag = 'smem constant byte address 0x4 - core index']
  #allocation1 [shape = 'u32[144,128]{1,0:T(1,128)}', space=vmem, size = 0x12000, scoped, tag = 'internal scratch']
  %s0 = inlined_call_operand.vmem [shape: bf16[256,128], index: 0, kind: input, shape index: {}]
  %s1 = inlined_call_operand.vmem [shape: bf16[32,256], index: 1, kind: input, shape index: {}]
  %s2 = inlined_call_operand.vmem [shape: f32[32,1], index: 2, kind: input, shape index: {}]
  %s3 = inlined_call_operand.vmem [shape: f32[32,1], index: 3, kind: input, shape index: {}]
  %s4 = inlined_call_operand.vmem [shape: bf16[32,128], index: 4, kind: output, shape index: {}]
  %s5 = sld [smem:[#allocation0]]
  $region26: #{discriminator_forward.7} parent=0
    _
  %s7 = ssub.s32 1, %s5
  %s8 = scalar_select 0, %s7, %s5
  // Predicated region
  $region2: #{discriminator_forward.7} parent=0 // pred_check
    _
  $region3: #{discriminator_forward.7} parent=0 // pred_check_branch
    %10 = sbr.rel (0) target = $region5
  $region4: #{discriminator_forward.7} parent=0 // pred_region
    _
  $region5: #{discriminator_forward.7} parent=0 // pred_fallthru
    _
  // Predicated region
  $region6: #{discriminator_forward.7} parent=0 // pred_check
    _
  $region7: #{discriminator_forward.7} parent=0 // pred_check_branch
    %12 = sbr.rel (0) target = $region9
  $region8: #{discriminator_forward.7} parent=0 // pred_region
    _
  $region9: #{discriminator_forward.7} parent=0 // pred_fallthru
    _
  // Predicated region
  $region10: #{discriminator_forward.7} parent=0 // pred_check
    _
  $region11: #{discriminator_forward.7} parent=0 // pred_check_branch
    %14 = sbr.rel (0) target = $region13
  $region12: #{discriminator_forward.7} parent=0 // pred_region
    _
  $region13: #{discriminator_forward.7} parent=0 // pred_fallthru
    _
  // Predicated region
  $region14: #{discriminator_forward.7} parent=0 // pred_check
    _
  $region15: #{discriminator_forward.7} parent=0 // pred_check_branch
    %16 = sbr.rel (0) target = $region17
  $region16: #{discriminator_forward.7} parent=0 // pred_region
    _
  $region17: #{discriminator_forward.7} parent=0 // pred_fallthru
    _
  %v18 = vld [vmem:[%s1] sm:$0xff]
  %v19 = vld [vmem:[%s1 + $0x8] sm:$0xff]
  %v20 = vld [vmem:[%s1 + $0x10] sm:$0xff]
  %v21 = vld [vmem:[%s1 + $0x18] sm:$0xff]
  %v22 = vld [vmem:[%s0] sm:$0xf]
  %v23 = vld [vmem:[%s0 + $0x4] sm:$0xf]
  %v24 = vld [vmem:[%s0 + $0x8] sm:$0xf]
  %v25 = vld [vmem:[%s0 + $0xc] sm:$0xf]
  %v26 = vld [vmem:[%s0 + $0x10] sm:$0xf]
  %v27 = vld [vmem:[%s0 + $0x14] sm:$0xf]
  %v28 = vld [vmem:[%s0 + $0x18] sm:$0xf]
  %v29 = vld [vmem:[%s0 + $0x1c] sm:$0xf]
  %v30 = vld [vmem:[%s0 + $0x20] sm:$0xf]
  %v31 = vld [vmem:[%s0 + $0x24] sm:$0xf]
  %v32 = vld [vmem:[%s0 + $0x28] sm:$0xf]
  %v33 = vld [vmem:[%s0 + $0x2c] sm:$0xf]
  %v34 = vld [vmem:[%s0 + $0x30] sm:$0xf]
  %v35 = vld [vmem:[%s0 + $0x34] sm:$0xf]
  %v36 = vld [vmem:[%s0 + $0x38] sm:$0xf]
  %v37 = vld [vmem:[%s0 + $0x3c] sm:$0xf]
  %v38 = vld [vmem:[%s0 + $0x40] sm:$0xf]
  %v39 = vld [vmem:[%s0 + $0x44] sm:$0xf]
  %v40 = vld [vmem:[%s0 + $0x48] sm:$0xf]
  %v41 = vld [vmem:[%s0 + $0x4c] sm:$0xf]
  %v42 = vld [vmem:[%s0 + $0x50] sm:$0xf]
  %v43 = vld [vmem:[%s0 + $0x54] sm:$0xf]
  %v44 = vld [vmem:[%s0 + $0x58] sm:$0xf]
  %v45 = vld [vmem:[%s0 + $0x5c] sm:$0xf]
  %v46 = vld [vmem:[%s0 + $0x60] sm:$0xf]
  %v47 = vld [vmem:[%s0 + $0x64] sm:$0xf]
  %v48 = vld [vmem:[%s0 + $0x68] sm:$0xf]
  %v49 = vld [vmem:[%s0 + $0x6c] sm:$0xf]
  %v50 = vld [vmem:[%s0 + $0x70] sm:$0xf]
  %v51 = vld [vmem:[%s0 + $0x74] sm:$0xf]
  %v52 = vld [vmem:[%s0 + $0x78] sm:$0xf]
  %v53 = vld [vmem:[%s0 + $0x7c] sm:$0xf]
  %v58 = vunpack.c.l.b16 %v18
  %v59 = vunpack.c.h.b16 %v18
  %v60 = vunpack.c.l.b16 %v19
  %v61 = vunpack.c.h.b16 %v19
  %v62 = vunpack.c.l.b16 %v20
  %v63 = vunpack.c.h.b16 %v20
  %v64 = vunpack.c.l.b16 %v21
  %v65 = vunpack.c.h.b16 %v21
  %v66 = vpack.c.b16 %v60, %v58
  %v67 = vpack.c.b16 %v61, %v59
  %v68 = vpack.c.b16 %v64, %v62
  %v69 = vpack.c.b16 %v65, %v63
  %v106 = vunpack.c.l.b16 %v22
  %v107 = vunpack.c.l.b16 %v23
  %v108 = vunpack.c.l.b16 %v24
  %v109 = vunpack.c.l.b16 %v25
  %v110 = vunpack.c.l.b16 %v26
  %v111 = vunpack.c.l.b16 %v27
  %v112 = vunpack.c.l.b16 %v28
  %v113 = vunpack.c.l.b16 %v29
  %v114 = vunpack.c.l.b16 %v30
  %v115 = vunpack.c.l.b16 %v31
  %v116 = vunpack.c.l.b16 %v32
  %v117 = vunpack.c.l.b16 %v33
  %v118 = vunpack.c.l.b16 %v34
  %v119 = vunpack.c.l.b16 %v35
  %v120 = vunpack.c.l.b16 %v36
  %v121 = vunpack.c.l.b16 %v37
  %v122 = vunpack.c.l.b16 %v38
  %v123 = vunpack.c.l.b16 %v39
  %v124 = vunpack.c.l.b16 %v40
  %v125 = vunpack.c.l.b16 %v41
  %v126 = vunpack.c.l.b16 %v42
  %v127 = vunpack.c.l.b16 %v43
  %v128 = vunpack.c.l.b16 %v44
  %v129 = vunpack.c.l.b16 %v45
  %v130 = vunpack.c.l.b16 %v46
  %v131 = vunpack.c.l.b16 %v47
  %v132 = vunpack.c.l.b16 %v48
  %v133 = vunpack.c.l.b16 %v49
  %v134 = vunpack.c.l.b16 %v50
  %v135 = vunpack.c.l.b16 %v51
  %v136 = vunpack.c.l.b16 %v52
  %v137 = vunpack.c.l.b16 %v53
  %v138 = vpack.c.b16 %v107, %v106
  %v139 = vpack.c.b16 %v109, %v108
  %v140 = vpack.c.b16 %v111, %v110
  %v141 = vpack.c.b16 %v113, %v112
  %v142 = vpack.c.b16 %v115, %v114
  %v143 = vpack.c.b16 %v117, %v116
  %v144 = vpack.c.b16 %v119, %v118
  %v145 = vpack.c.b16 %v121, %v120
  %v146 = vpack.c.b16 %v123, %v122
  %v147 = vpack.c.b16 %v125, %v124
  %v148 = vpack.c.b16 %v127, %v126
  %v149 = vpack.c.b16 %v129, %v128
  %v150 = vpack.c.b16 %v131, %v130
  %v151 = vpack.c.b16 %v133, %v132
  %v152 = vpack.c.b16 %v135, %v134
  %v153 = vpack.c.b16 %v137, %v136
  %170 = vmatprep.subr.bf16.mxu0 0
  %171 = vmatpush1.bf16.msra.mxu0 %v138
  %172 = vmatprep.subr.bf16.mxu0 0
  %173 = vmatpush1.bf16.msra.mxu0 %v139
  %174 = vmatprep.subr.bf16.mxu0 0
  %175 = vmatpush1.bf16.msra.mxu0 %v140
  %176 = vmatprep.subr.bf16.mxu0 0
  %177 = vmatpush1.bf16.msra.mxu0 %v141
  %178 = vmatprep.subr.bf16.mxu0 0
  %179 = vmatpush1.bf16.msra.mxu0 %v142
  %180 = vmatprep.subr.bf16.mxu0 0
  %181 = vmatpush1.bf16.msra.mxu0 %v143
  %182 = vmatprep.subr.bf16.mxu0 0
  %183 = vmatpush1.bf16.msra.mxu0 %v144
  %184 = vmatprep.subr.bf16.mxu0 0
  %185 = vmatpush1.bf16.msra.mxu0 %v145
  %186 = vmatprep.subr.bf16.mxu0 0
  %187 = vmatpush1.bf16.msra.mxu0 %v146
  %188 = vmatprep.subr.bf16.mxu0 0
  %189 = vmatpush1.bf16.msra.mxu0 %v147
  %190 = vmatprep.subr.bf16.mxu0 0
  %191 = vmatpush1.bf16.msra.mxu0 %v148
  %192 = vmatprep.subr.bf16.mxu0 0
  %193 = vmatpush1.bf16.msra.mxu0 %v149
  %194 = vmatprep.subr.bf16.mxu0 0
  %195 = vmatpush1.bf16.msra.mxu0 %v150
  %196 = vmatprep.subr.bf16.mxu0 0
  %197 = vmatpush1.bf16.msra.mxu0 %v151
  %198 = vmatprep.subr.bf16.mxu0 0
  %199 = vmatpush1.bf16.msra.mxu0 %v152
  %200 = vmatprep.subr.bf16.mxu0 0
  %201 = vmatpush1.bf16.msra.mxu0 %v153
  %202 = vmatprep.mubr.bf16.mxu0 %v67
  %203 = vmatmul.mubr.bf16.gmra.mrb[0].mxu0 %v66
  %v204 = vpop.f32.mrb[0].mxu0
  %v205 = vadd.f32 0.0, %v204
  %v206 = vpop.f32.mrb[0].mxu0
  %v207 = vpop.f32.mrb[0].mxu0
  %v208 = vadd.f32 0.0, %v207
  %v209 = vpop.f32.mrb[0].mxu0
  %210 = vmatprep.mubr.bf16.mxu0 %v69
  %211 = vmatmul.mubr.bf16.gmra.mrb[0].mxu0 %v68
  %v212 = vpop.f32.mrb[0].mxu0
  %v213 = vadd.f32 0.0, %v212
  %v214 = vpop.f32.mrb[0].mxu0
  %v215 = vpop.f32.mrb[0].mxu0
  %v216 = vadd.f32 0.0, %v215
  %v217 = vpop.f32.mrb[0].mxu0
  %218 = vdwg.mxu0
  %v219 = vlaneseq
  %v220 = vand.u32 %v219, 127
  %vm221 = vcmp.lt.s32.totalorder %v220, 32
  %v222 = vsel %vm221, %v205, 0.0
  %v223 = vsel %vm221, %v208, 0.0
  %v224 = vsel %vm221, %v213, 0.0
  %v225 = vsel %vm221, %v216, 0.0
  %226 = vadd.xlane.f32.xlu0 %v222
  %v227 = vpop.xlane.xlu0 %226
  %228 = vadd.xlane.f32.xlu0 %v223
  %v229 = vpop.xlane.xlu0 %228
  %230 = vadd.xlane.f32.xlu0 %v224
  %v231 = vpop.xlane.xlu0 %230
  %232 = vadd.xlane.f32.xlu0 %v225
  %v233 = vpop.xlane.xlu0 %232
  %v234 = vmul.f32 %v227, 0.03125
  %v235 = vmul.f32 %v229, 0.03125
  %v236 = vmul.f32 %v231, 0.03125
  %v237 = vmul.f32 %v233, 0.03125
  %v238 = vmul.f32 %v222, %v222
  %v239 = vmul.f32 %v223, %v223
  %v240 = vmul.f32 %v224, %v224
  %v241 = vmul.f32 %v225, %v225
  %242 = vadd.xlane.f32.xlu0 %v238
  %v243 = vpop.xlane.xlu0 %242
  %244 = vadd.xlane.f32.xlu0 %v239
  %v245 = vpop.xlane.xlu0 %244
  %246 = vadd.xlane.f32.xlu0 %v240
  %v247 = vpop.xlane.xlu0 %246
  %248 = vadd.xlane.f32.xlu0 %v241
  %v249 = vpop.xlane.xlu0 %248
  %v250 = vmul.f32 %v243, 0.03125
  %v251 = vmul.f32 %v245, 0.03125
  %v252 = vmul.f32 %v247, 0.03125
  %v253 = vmul.f32 %v249, 0.03125
  %v254 = vmul.f32 %v234, %v234
  %v255 = vmul.f32 %v235, %v235
  %v256 = vmul.f32 %v236, %v236
  %v257 = vmul.f32 %v237, %v237
  %v258 = vsub.f32 %v250, %v254
  %v259 = vsub.f32 %v251, %v255
  %v260 = vsub.f32 %v252, %v256
  %v261 = vsub.f32 %v253, %v257
  %v262 = vmax.f32 %v258, 0.0
  %v263 = vmax.f32 %v259, 0.0
  %v264 = vmax.f32 %v260, 0.0
  %v265 = vmax.f32 %v261, 0.0
  %v266 = vld [vmem:[%s2] sm:$0xff]
  %v267 = vld [vmem:[%s2 + $0x8] sm:$0xff]
  %v268 = vld [vmem:[%s2 + $0x10] sm:$0xff]
  %v269 = vld [vmem:[%s2 + $0x18] sm:$0xff]
  %v270 = vadd.f32 %v262, 1e-05
  %v271 = vadd.f32 %v263, 1e-05
  %v272 = vadd.f32 %v264, 1e-05
  %v273 = vadd.f32 %v265, 1e-05
  %v274 = vrsqrt.pop %v270
  %v275 = vrsqrt.pop %v271
  %v276 = vrsqrt.pop %v272
  %v277 = vrsqrt.pop %v273
  %v278 = vmul.f32 %v266, %v274
  %v279 = vmul.f32 %v267, %v275
  %v280 = vmul.f32 %v268, %v276
  %v281 = vmul.f32 %v269, %v277
  %v282 = vsub.f32 %v205, %v234
  %v283 = vsub.f32 %v208, %v235
  %v284 = vsub.f32 %v213, %v236
  %v285 = vsub.f32 %v216, %v237
  %287 = vset.pattern.permute.xlu0 0
  %288 = vperm.xlu0 %287, %v278
  %v289 = vpop.permute.xlu0 %288
  %292 = vset.pattern.permute.xlu0 0
  %293 = vperm.xlu0 %292, %v279
  %v294 = vpop.permute.xlu0 %293
  %297 = vset.pattern.permute.xlu0 0
  %298 = vperm.xlu0 %297, %v280
  %v299 = vpop.permute.xlu0 %298
  %302 = vset.pattern.permute.xlu0 0
  %303 = vperm.xlu0 %302, %v281
  %v304 = vpop.permute.xlu0 %303
  %v306 = vmul.f32 %v282, %v289
  %v307 = vmul.f32 %v283, %v294
  %v308 = vmul.f32 %v284, %v299
  %v309 = vmul.f32 %v285, %v304
  %v310 = vld [vmem:[%s3] sm:$0xff]
  %v311 = vld [vmem:[%s3 + $0x8] sm:$0xff]
  %v312 = vld [vmem:[%s3 + $0x10] sm:$0xff]
  %v313 = vld [vmem:[%s3 + $0x18] sm:$0xff]
  %315 = vset.pattern.permute.xlu0 0
  %316 = vperm.xlu0 %315, %v310
  %v317 = vpop.permute.xlu0 %316
  %320 = vset.pattern.permute.xlu0 0
  %321 = vperm.xlu0 %320, %v311
  %v322 = vpop.permute.xlu0 %321
  %325 = vset.pattern.permute.xlu0 0
  %326 = vperm.xlu0 %325, %v312
  %v327 = vpop.permute.xlu0 %326
  %330 = vset.pattern.permute.xlu0 0
  %331 = vperm.xlu0 %330, %v313
  %v332 = vpop.permute.xlu0 %331
  %v334 = vadd.f32 %v306, %v317
  %v335 = vadd.f32 %v307, %v322
  %v336 = vadd.f32 %v308, %v327
  %v337 = vadd.f32 %v309, %v332
  %vm338 = vcmp.ge.f32.partialorder %v334, 0.0
  %vm339 = vcmp.ge.f32.partialorder %v335, 0.0
  %vm340 = vcmp.ge.f32.partialorder %v336, 0.0
  %vm341 = vcmp.ge.f32.partialorder %v337, 0.0
  %v342 = vmul.f32 %v334, 0.2
  %v343 = vmul.f32 %v335, 0.2
  %v344 = vmul.f32 %v336, 0.2
  %v345 = vmul.f32 %v337, 0.2
  %v346 = vsel %vm338, %v334, %v342
  %v347 = vsel %vm339, %v335, %v343
  %v348 = vsel %vm340, %v336, %v344
  %v349 = vsel %vm341, %v337, %v345
  %v350 = vpack.c.bf16 %v347, %v346
  %v351 = vpack.c.bf16 %v349, %v348
  %v354 = vunpack.c.l.b16 %v350
  %v355 = vunpack.c.h.b16 %v350
  %v356 = vunpack.c.l.b16 %v351
  %v357 = vunpack.c.h.b16 %v351
  %v358 = vpack.c.b16 %v354, %v354
  %v359 = vpack.c.b16 %v355, %v355
  %v360 = vpack.c.b16 %v356, %v356
  %v361 = vpack.c.b16 %v357, %v357
  %366 = vst [vmem:[%s4] sm:$0xf] %v358
  %367 = vst [vmem:[%s4 + $0x4] sm:$0xf] %v359
  %368 = vst [vmem:[%s4 + $0x8] sm:$0xf] %v360
  %369 = vst [vmem:[%s4 + $0xc] sm:$0xf] %v361
  // Predicated region
  $region18: #{discriminator_forward.7} parent=0 // pred_check
    _
  $region19: #{discriminator_forward.7} parent=0 // pred_check_branch
    %371 = sbr.rel (0) target = $region21
  $region20: #{discriminator_forward.7} parent=0 // pred_region
    _
  $region21: #{discriminator_forward.7} parent=0 // pred_fallthru
    _
  // Predicated region
  $region22: #{discriminator_forward.7} parent=0 // pred_check
    _
  $region23: #{discriminator_forward.7} parent=0 // pred_check_branch
    %373 = sbr.rel (0) target = $region25
  $region24: #{discriminator_forward.7} parent=0 // pred_region
    _
  $region25: #{discriminator_forward.7} parent=0 // pred_fallthru
    _

// kernel: discriminator_forward.8
$region0: #{discriminator_forward.8}
  #allocation0 [shape = 'u32[]', space=smem, size = 0x4, offset = 0x4, fixed_abs, tag = 'smem constant byte address 0x4 - core index']
  #allocation1 [shape = 'u32[144,128]{1,0:T(1,128)}', space=vmem, size = 0x12000, scoped, tag = 'internal scratch']
  %s0 = inlined_call_operand.vmem [shape: bf16[512,128], index: 0, kind: input, shape index: {}]
  %s1 = inlined_call_operand.vmem [shape: bf16[64,512], index: 1, kind: input, shape index: {}]
  %s2 = inlined_call_operand.vmem [shape: f32[64,1], index: 2, kind: input, shape index: {}]
  %s3 = inlined_call_operand.vmem [shape: f32[64,1], index: 3, kind: input, shape index: {}]
  %s4 = inlined_call_operand.vmem [shape: bf16[64,128], index: 4, kind: output, shape index: {}]
  %s5 = sld [smem:[#allocation0]]
  $region26: #{discriminator_forward.8} parent=0
    _
  %s7 = ssub.s32 1, %s5
  %s8 = scalar_select 0, %s7, %s5
  // Predicated region
  $region2: #{discriminator_forward.8} parent=0 // pred_check
    _
  $region3: #{discriminator_forward.8} parent=0 // pred_check_branch
    %10 = sbr.rel (0) target = $region5
  $region4: #{discriminator_forward.8} parent=0 // pred_region
    _
  $region5: #{discriminator_forward.8} parent=0 // pred_fallthru
    _
  // Predicated region
  $region6: #{discriminator_forward.8} parent=0 // pred_check
    _
  $region7: #{discriminator_forward.8} parent=0 // pred_check_branch
    %12 = sbr.rel (0) target = $region9
  $region8: #{discriminator_forward.8} parent=0 // pred_region
    _
  $region9: #{discriminator_forward.8} parent=0 // pred_fallthru
    _
  // Predicated region
  $region10: #{discriminator_forward.8} parent=0 // pred_check
    _
  $region11: #{discriminator_forward.8} parent=0 // pred_check_branch
    %14 = sbr.rel (0) target = $region13
  $region12: #{discriminator_forward.8} parent=0 // pred_region
    _
  $region13: #{discriminator_forward.8} parent=0 // pred_fallthru
    _
  // Predicated region
  $region14: #{discriminator_forward.8} parent=0 // pred_check
    _
  $region15: #{discriminator_forward.8} parent=0 // pred_check_branch
    %16 = sbr.rel (0) target = $region17
  $region16: #{discriminator_forward.8} parent=0 // pred_region
    _
  $region17: #{discriminator_forward.8} parent=0 // pred_fallthru
    _
  %v18 = vld [vmem:[%s1] sm:$0xff]
  %v19 = vld [vmem:[%s1 + $0x8] sm:$0xff]
  %v20 = vld [vmem:[%s1 + $0x10] sm:$0xff]
  %v21 = vld [vmem:[%s1 + $0x18] sm:$0xff]
  %v22 = vld [vmem:[%s1 + $0x20] sm:$0xff]
  %v23 = vld [vmem:[%s1 + $0x28] sm:$0xff]
  %v24 = vld [vmem:[%s1 + $0x30] sm:$0xff]
  %v25 = vld [vmem:[%s1 + $0x38] sm:$0xff]
  %v26 = vld [vmem:[%s1 + $0x40] sm:$0xff]
  %v27 = vld [vmem:[%s1 + $0x48] sm:$0xff]
  %v28 = vld [vmem:[%s1 + $0x50] sm:$0xff]
  %v29 = vld [vmem:[%s1 + $0x58] sm:$0xff]
  %v30 = vld [vmem:[%s1 + $0x60] sm:$0xff]
  %v31 = vld [vmem:[%s1 + $0x68] sm:$0xff]
  %v32 = vld [vmem:[%s1 + $0x70] sm:$0xff]
  %v33 = vld [vmem:[%s1 + $0x78] sm:$0xff]
  %v34 = vld [vmem:[%s0] sm:$0xf]
  %v35 = vld [vmem:[%s0 + $0x4] sm:$0xf]
  %v36 = vld [vmem:[%s0 + $0x8] sm:$0xf]
  %v37 = vld [vmem:[%s0 + $0xc] sm:$0xf]
  %v38 = vld [vmem:[%s0 + $0x10] sm:$0xf]
  %v39 = vld [vmem:[%s0 + $0x14] sm:$0xf]
  %v40 = vld [vmem:[%s0 + $0x18] sm:$0xf]
  %v41 = vld [vmem:[%s0 + $0x1c] sm:$0xf]
  %v42 = vld [vmem:[%s0 + $0x20] sm:$0xf]
  %v43 = vld [vmem:[%s0 + $0x24] sm:$0xf]
  %v44 = vld [vmem:[%s0 + $0x28] sm:$0xf]
  %v45 = vld [vmem:[%s0 + $0x2c] sm:$0xf]
  %v46 = vld [vmem:[%s0 + $0x30] sm:$0xf]
  %v47 = vld [vmem:[%s0 + $0x34] sm:$0xf]
  %v48 = vld [vmem:[%s0 + $0x38] sm:$0xf]
  %v49 = vld [vmem:[%s0 + $0x3c] sm:$0xf]
  %v50 = vld [vmem:[%s0 + $0x40] sm:$0xf]
  %v51 = vld [vmem:[%s0 + $0x44] sm:$0xf]
  %v52 = vld [vmem:[%s0 + $0x48] sm:$0xf]
  %v53 = vld [vmem:[%s0 + $0x4c] sm:$0xf]
  %v54 = vld [vmem:[%s0 + $0x50] sm:$0xf]
  %v55 = vld [vmem:[%s0 + $0x54] sm:$0xf]
  %v56 = vld [vmem:[%s0 + $0x58] sm:$0xf]
  %v57 = vld [vmem:[%s0 + $0x5c] sm:$0xf]
  %v58 = vld [vmem:[%s0 + $0x60] sm:$0xf]
  %v59 = vld [vmem:[%s0 + $0x64] sm:$0xf]
  %v60 = vld [vmem:[%s0 + $0x68] sm:$0xf]
  %v61 = vld [vmem:[%s0 + $0x6c] sm:$0xf]
  %v62 = vld [vmem:[%s0 + $0x70] sm:$0xf]
  %v63 = vld [vmem:[%s0 + $0x74] sm:$0xf]
  %v64 = vld [vmem:[%s0 + $0x78] sm:$0xf]
  %v65 = vld [vmem:[%s0 + $0x7c] sm:$0xf]
  %v66 = vld [vmem:[%s0 + $0x80] sm:$0xf]
  %v67 = vld [vmem:[%s0 + $0x84] sm:$0xf]
  %v68 = vld [vmem:[%s0 + $0x88] sm:$0xf]
  %v69 = vld [vmem:[%s0 + $0x8c] sm:$0xf]
  %v70 = vld [vmem:[%s0 + $0x90] sm:$0xf]
  %v71 = vld [vmem:[%s0 + $0x94] sm:$0xf]
  %v72 = vld [vmem:[%s0 + $0x98] sm:$0xf]
  %v73 = vld [vmem:[%s0 + $0x9c] sm:$0xf]
  %v74 = vld [vmem:[%s0 + $0xa0] sm:$0xf]
  %v75 = vld [vmem:[%s0 + $0xa4] sm:$0xf]
  %v76 = vld [vmem:[%s0 + $0xa8] sm:$0xf]
  %v77 = vld [vmem:[%s0 + $0xac] sm:$0xf]
  %v78 = vld [vmem:[%s0 + $0xb0] sm:$0xf]
  %v79 = vld [vmem:[%s0 + $0xb4] sm:$0xf]
  %v80 = vld [vmem:[%s0 + $0xb8] sm:$0xf]
  %v81 = vld [vmem:[%s0 + $0xbc] sm:$0xf]
  %v82 = vld [vmem:[%s0 + $0xc0] sm:$0xf]
  %v83 = vld [vmem:[%s0 + $0xc4] sm:$0xf]
  %v84 = vld [vmem:[%s0 + $0xc8] sm:$0xf]
  %v85 = vld [vmem:[%s0 + $0xcc] sm:$0xf]
  %v86 = vld [vmem:[%s0 + $0xd0] sm:$0xf]
  %v87 = vld [vmem:[%s0 + $0xd4] sm:$0xf]
  %v88 = vld [vmem:[%s0 + $0xd8] sm:$0xf]
  %v89 = vld [vmem:[%s0 + $0xdc] sm:$0xf]
  %v90 = vld [vmem:[%s0 + $0xe0] sm:$0xf]
  %v91 = vld [vmem:[%s0 + $0xe4] sm:$0xf]
  %v92 = vld [vmem:[%s0 + $0xe8] sm:$0xf]
  %v93 = vld [vmem:[%s0 + $0xec] sm:$0xf]
  %v94 = vld [vmem:[%s0 + $0xf0] sm:$0xf]
  %v95 = vld [vmem:[%s0 + $0xf4] sm:$0xf]
  %v96 = vld [vmem:[%s0 + $0xf8] sm:$0xf]
  %v97 = vld [vmem:[%s0 + $0xfc] sm:$0xf]
  %v114 = vunpack.c.l.b16 %v18
  %v115 = vunpack.c.h.b16 %v18
  %v116 = vunpack.c.l.b16 %v19
  %v117 = vunpack.c.h.b16 %v19
  %v118 = vunpack.c.l.b16 %v20
  %v119 = vunpack.c.h.b16 %v20
  %v120 = vunpack.c.l.b16 %v21
  %v121 = vunpack.c.h.b16 %v21
  %v122 = vunpack.c.l.b16 %v22
  %v123 = vunpack.c.h.b16 %v22
  %v124 = vunpack.c.l.b16 %v23
  %v125 = vunpack.c.h.b16 %v23
  %v126 = vunpack.c.l.b16 %v24
  %v127 = vunpack.c.h.b16 %v24
  %v128 = vunpack.c.l.b16 %v25
  %v129 = vunpack.c.h.b16 %v25
  %v130 = vunpack.c.l.b16 %v26
  %v131 = vunpack.c.h.b16 %v26
  %v132 = vunpack.c.l.b16 %v27
  %v133 = vunpack.c.h.b16 %v27
  %v134 = vunpack.c.l.b16 %v28
  %v135 = vunpack.c.h.b16 %v28
  %v136 = vunpack.c.l.b16 %v29
  %v137 = vunpack.c.h.b16 %v29
  %v138 = vunpack.c.l.b16 %v30
  %v139 = vunpack.c.h.b16 %v30
  %v140 = vunpack.c.l.b16 %v31
  %v141 = vunpack.c.h.b16 %v31
  %v142 = vunpack.c.l.b16 %v32
  %v143 = vunpack.c.h.b16 %v32
  %v144 = vunpack.c.l.b16 %v33
  %v145 = vunpack.c.h.b16 %v33
  %v146 = vpack.c.b16 %v118, %v114
  %v147 = vpack.c.b16 %v119, %v115
  %v148 = vpack.c.b16 %v120, %v116
  %v149 = vpack.c.b16 %v121, %v117
  %v150 = vpack.c.b16 %v126, %v122
  %v151 = vpack.c.b16 %v127, %v123
  %v152 = vpack.c.b16 %v128, %v124
  %v153 = vpack.c.b16 %v129, %v125
  %v154 = vpack.c.b16 %v134, %v130
  %v155 = vpack.c.b16 %v135, %v131
  %v156 = vpack.c.b16 %v136, %v132
  %v157 = vpack.c.b16 %v137, %v133
  %v158 = vpack.c.b16 %v142, %v138
  %v159 = vpack.c.b16 %v143, %v139
  %v160 = vpack.c.b16 %v144, %v140
  %v161 = vpack.c.b16 %v145, %v141
  %v242 = vunpack.c.l.b16 %v34
  %v243 = vunpack.c.l.b16 %v35
  %v244 = vunpack.c.l.b16 %v36
  %v245 = vunpack.c.l.b16 %v37
  %v246 = vunpack.c.l.b16 %v38
  %v247 = vunpack.c.l.b16 %v39
  %v248 = vunpack.c.l.b16 %v40
  %v249 = vunpack.c.l.b16 %v41
  %v250 = vunpack.c.l.b16 %v42
  %v251 = vunpack.c.l.b16 %v43
  %v252 = vunpack.c.l.b16 %v44
  %v253 = vunpack.c.l.b16 %v45
  %v254 = vunpack.c.l.b16 %v46
  %v255 = vunpack.c.l.b16 %v47
  %v256 = vunpack.c.l.b16 %v48
  %v257 = vunpack.c.l.b16 %v49
  %v258 = vunpack.c.l.b16 %v50
  %v259 = vunpack.c.l.b16 %v51
  %v260 = vunpack.c.l.b16 %v52
  %v261 = vunpack.c.l.b16 %v53
  %v262 = vunpack.c.l.b16 %v54
  %v263 = vunpack.c.l.b16 %v55
  %v264 = vunpack.c.l.b16 %v56
  %v265 = vunpack.c.l.b16 %v57
  %v266 = vunpack.c.l.b16 %v58
  %v267 = vunpack.c.l.b16 %v59
  %v268 = vunpack.c.l.b16 %v60
  %v269 = vunpack.c.l.b16 %v61
  %v270 = vunpack.c.l.b16 %v62
  %v271 = vunpack.c.l.b16 %v63
  %v272 = vunpack.c.l.b16 %v64
  %v273 = vunpack.c.l.b16 %v65
  %v274 = vunpack.c.l.b16 %v66
  %v275 = vunpack.c.l.b16 %v67
  %v276 = vunpack.c.l.b16 %v68
  %v277 = vunpack.c.l.b16 %v69
  %v278 = vunpack.c.l.b16 %v70
  %v279 = vunpack.c.l.b16 %v71
  %v280 = vunpack.c.l.b16 %v72
  %v281 = vunpack.c.l.b16 %v73
  %v282 = vunpack.c.l.b16 %v74
  %v283 = vunpack.c.l.b16 %v75
  %v284 = vunpack.c.l.b16 %v76
  %v285 = vunpack.c.l.b16 %v77
  %v286 = vunpack.c.l.b16 %v78
  %v287 = vunpack.c.l.b16 %v79
  %v288 = vunpack.c.l.b16 %v80
  %v289 = vunpack.c.l.b16 %v81
  %v290 = vunpack.c.l.b16 %v82
  %v291 = vunpack.c.l.b16 %v83
  %v292 = vunpack.c.l.b16 %v84
  %v293 = vunpack.c.l.b16 %v85
  %v294 = vunpack.c.l.b16 %v86
  %v295 = vunpack.c.l.b16 %v87
  %v296 = vunpack.c.l.b16 %v88
  %v297 = vunpack.c.l.b16 %v89
  %v298 = vunpack.c.l.b16 %v90
  %v299 = vunpack.c.l.b16 %v91
  %v300 = vunpack.c.l.b16 %v92
  %v301 = vunpack.c.l.b16 %v93
  %v302 = vunpack.c.l.b16 %v94
  %v303 = vunpack.c.l.b16 %v95
  %v304 = vunpack.c.l.b16 %v96
  %v305 = vunpack.c.l.b16 %v97
  %v306 = vpack.c.b16 %v243, %v242
  %v307 = vpack.c.b16 %v245, %v244
  %v308 = vpack.c.b16 %v247, %v246
  %v309 = vpack.c.b16 %v249, %v248
  %v310 = vpack.c.b16 %v251, %v250
  %v311 = vpack.c.b16 %v253, %v252
  %v312 = vpack.c.b16 %v255, %v254
  %v313 = vpack.c.b16 %v257, %v256
  %v314 = vpack.c.b16 %v259, %v258
  %v315 = vpack.c.b16 %v261, %v260
  %v316 = vpack.c.b16 %v263, %v262
  %v317 = vpack.c.b16 %v265, %v264
  %v318 = vpack.c.b16 %v267, %v266
  %v319 = vpack.c.b16 %v269, %v268
  %v320 = vpack.c.b16 %v271, %v270
  %v321 = vpack.c.b16 %v273, %v272
  %v322 = vpack.c.b16 %v275, %v274
  %v323 = vpack.c.b16 %v277, %v276
  %v324 = vpack.c.b16 %v279, %v278
  %v325 = vpack.c.b16 %v281, %v280
  %v326 = vpack.c.b16 %v283, %v282
  %v327 = vpack.c.b16 %v285, %v284
  %v328 = vpack.c.b16 %v287, %v286
  %v329 = vpack.c.b16 %v289, %v288
  %v330 = vpack.c.b16 %v291, %v290
  %v331 = vpack.c.b16 %v293, %v292
  %v332 = vpack.c.b16 %v295, %v294
  %v333 = vpack.c.b16 %v297, %v296
  %v334 = vpack.c.b16 %v299, %v298
  %v335 = vpack.c.b16 %v301, %v300
  %v336 = vpack.c.b16 %v303, %v302
  %v337 = vpack.c.b16 %v305, %v304
  %370 = vmatprep.subr.bf16.mxu0 0
  %371 = vmatpush1.bf16.msra.mxu0 %v306
  %372 = vmatprep.subr.bf16.mxu0 0
  %373 = vmatpush1.bf16.msra.mxu0 %v307
  %374 = vmatprep.subr.bf16.mxu0 0
  %375 = vmatpush1.bf16.msra.mxu0 %v308
  %376 = vmatprep.subr.bf16.mxu0 0
  %377 = vmatpush1.bf16.msra.mxu0 %v309
  %378 = vmatprep.subr.bf16.mxu0 0
  %379 = vmatpush1.bf16.msra.mxu0 %v310
  %380 = vmatprep.subr.bf16.mxu0 0
  %381 = vmatpush1.bf16.msra.mxu0 %v311
  %382 = vmatprep.subr.bf16.mxu0 0
  %383 = vmatpush1.bf16.msra.mxu0 %v312
  %384 = vmatprep.subr.bf16.mxu0 0
  %385 = vmatpush1.bf16.msra.mxu0 %v313
  %386 = vmatprep.subr.bf16.mxu0 0
  %387 = vmatpush1.bf16.msra.mxu0 %v314
  %388 = vmatprep.subr.bf16.mxu0 0
  %389 = vmatpush1.bf16.msra.mxu0 %v315
  %390 = vmatprep.subr.bf16.mxu0 0
  %391 = vmatpush1.bf16.msra.mxu0 %v316
  %392 = vmatprep.subr.bf16.mxu0 0
  %393 = vmatpush1.bf16.msra.mxu0 %v317
  %394 = vmatprep.subr.bf16.mxu0 0
  %395 = vmatpush1.bf16.msra.mxu0 %v318
  %396 = vmatprep.subr.bf16.mxu0 0
  %397 = vmatpush1.bf16.msra.mxu0 %v319
  %398 = vmatprep.subr.bf16.mxu0 0
  %399 = vmatpush1.bf16.msra.mxu0 %v320
  %400 = vmatprep.subr.bf16.mxu0 0
  %401 = vmatpush1.bf16.msra.mxu0 %v321
  %402 = vmatprep.mubr.bf16.mxu0 %v147
  %403 = vmatmul.mubr.bf16.gmra.mrb[0].mxu0 %v146
  %v404 = vpop.f32.mrb[0].mxu0
  %v405 = vadd.f32 0.0, %v404
  %v406 = vpop.f32.mrb[0].mxu0
  %v407 = vpop.f32.mrb[0].mxu0
  %v408 = vadd.f32 0.0, %v407
  %v409 = vpop.f32.mrb[0].mxu0
  %410 = vmatprep.mubr.bf16.mxu0 %v151
  %411 = vmatmul.mubr.bf16.gmra.mrb[0].mxu0 %v150
  %v412 = vpop.f32.mrb[0].mxu0
  %v413 = vadd.f32 0.0, %v412
  %v414 = vpop.f32.mrb[0].mxu0
  %v415 = vpop.f32.mrb[0].mxu0
  %v416 = vadd.f32 0.0, %v415
  %v417 = vpop.f32.mrb[0].mxu0
  %418 = vmatprep.mubr.bf16.mxu0 %v155
  %419 = vmatmul.mubr.bf16.gmra.mrb[0].mxu0 %v154
  %v420 = vpop.f32.mrb[0].mxu0
  %v421 = vadd.f32 0.0, %v420
  %v422 = vpop.f32.mrb[0].mxu0
  %v423 = vpop.f32.mrb[0].mxu0
  %v424 = vadd.f32 0.0, %v423
  %v425 = vpop.f32.mrb[0].mxu0
  %426 = vmatprep.mubr.bf16.mxu0 %v159
  %427 = vmatmul.mubr.bf16.gmra.mrb[0].mxu0 %v158
  %v428 = vpop.f32.mrb[0].mxu0
  %v429 = vadd.f32 0.0, %v428
  %v430 = vpop.f32.mrb[0].mxu0
  %v431 = vpop.f32.mrb[0].mxu0
  %v432 = vadd.f32 0.0, %v431
  %v433 = vpop.f32.mrb[0].mxu0
  %434 = vdwg.mxu0
  %435 = vmatprep.subr.bf16.mxu0 0
  %436 = vmatpush1.bf16.msra.mxu0 %v322
  %437 = vmatprep.subr.bf16.mxu0 0
  %438 = vmatpush1.bf16.msra.mxu0 %v323
  %439 = vmatprep.subr.bf16.mxu0 0
  %440 = vmatpush1.bf16.msra.mxu0 %v324
  %441 = vmatprep.subr.bf16.mxu0 0
  %442 = vmatpush1.bf16.msra.mxu0 %v325
  %443 = vmatprep.subr.bf16.mxu0 0
  %444 = vmatpush1.bf16.msra.mxu0 %v326
  %445 = vmatprep.subr.bf16.mxu0 0
  %446 = vmatpush1.bf16.msra.mxu0 %v327
  %447 = vmatprep.subr.bf16.mxu0 0
  %448 = vmatpush1.bf16.msra.mxu0 %v328
  %449 = vmatprep.subr.bf16.mxu0 0
  %450 = vmatpush1.bf16.msra.mxu0 %v329
  %451 = vmatprep.subr.bf16.mxu0 0
  %452 = vmatpush1.bf16.msra.mxu0 %v330
  %453 = vmatprep.subr.bf16.mxu0 0
  %454 = vmatpush1.bf16.msra.mxu0 %v331
  %455 = vmatprep.subr.bf16.mxu0 0
  %456 = vmatpush1.bf16.msra.mxu0 %v332
  %457 = vmatprep.subr.bf16.mxu0 0
  %458 = vmatpush1.bf16.msra.mxu0 %v333
  %459 = vmatprep.subr.bf16.mxu0 0
  %460 = vmatpush1.bf16.msra.mxu0 %v334
  %461 = vmatprep.subr.bf16.mxu0 0
  %462 = vmatpush1.bf16.msra.mxu0 %v335
  %463 = vmatprep.subr.bf16.mxu0 0
  %464 = vmatpush1.bf16.msra.mxu0 %v336
  %465 = vmatprep.subr.bf16.mxu0 0
  %466 = vmatpush1.bf16.msra.mxu0 %v337
  %467 = vmatprep.mubr.bf16.mxu0 %v149
  %468 = vmatmul.mubr.bf16.gmra.mrb[0].mxu0 %v148
  %v469 = vpop.f32.mrb[0].mxu0
  %v470 = vadd.f32 %v405, %v469
  %v471 = vpop.f32.mrb[0].mxu0
  %v472 = vpop.f32.mrb[0].mxu0
  %v473 = vadd.f32 %v408, %v472
  %v474 = vpop.f32.mrb[0].mxu0
  %475 = vmatprep.mubr.bf16.mxu0 %v153
  %476 = vmatmul.mubr.bf16.gmra.mrb[0].mxu0 %v152
  %v477 = vpop.f32.mrb[0].mxu0
  %v478 = vadd.f32 %v413, %v477
  %v479 = vpop.f32.mrb[0].mxu0
  %v480 = vpop.f32.mrb[0].mxu0
  %v481 = vadd.f32 %v416, %v480
  %v482 = vpop.f32.mrb[0].mxu0
  %483 = vmatprep.mubr.bf16.mxu0 %v157
  %484 = vmatmul.mubr.bf16.gmra.mrb[0].mxu0 %v156
  %v485 = vpop.f32.mrb[0].mxu0
  %v486 = vadd.f32 %v421, %v485
  %v487 = vpop.f32.mrb[0].mxu0
  %v488 = vpop.f32.mrb[0].mxu0
  %v489 = vadd.f32 %v424, %v488
  %v490 = vpop.f32.mrb[0].mxu0
  %491 = vmatprep.mubr.bf16.mxu0 %v161
  %492 = vmatmul.mubr.bf16.gmra.mrb[0].mxu0 %v160
  %v493 = vpop.f32.mrb[0].mxu0
  %v494 = vadd.f32 %v429, %v493
  %v495 = vpop.f32.mrb[0].mxu0
  %v496 = vpop.f32.mrb[0].mxu0
  %v497 = vadd.f32 %v432, %v496
  %v498 = vpop.f32.mrb[0].mxu0
  %499 = vdwg.mxu0
  %v500 = vlaneseq
  %v501 = vand.u32 %v500, 127
  %vm502 = vcmp.lt.s32.totalorder %v501, 18
  %v503 = vsel %vm502, %v470, 0.0
  %v504 = vsel %vm502, %v473, 0.0
  %v505 = vsel %vm502, %v478, 0.0
  %v506 = vsel %vm502, %v481, 0.0
  %v507 = vsel %vm502, %v486, 0.0
  %v508 = vsel %vm502, %v489, 0.0
  %v509 = vsel %vm502, %v494, 0.0
  %v510 = vsel %vm502, %v497, 0.0
  %511 = vadd.xlane.f32.xlu0 %v503
  %v512 = vpop.xlane.xlu0 %511
  %513 = vadd.xlane.f32.xlu0 %v504
  %v514 = vpop.xlane.xlu0 %513
  %515 = vadd.xlane.f32.xlu0 %v505
  %v516 = vpop.xlane.xlu0 %515
  %517 = vadd.xlane.f32.xlu0 %v506
  %v518 = vpop.xlane.xlu0 %517
  %519 = vadd.xlane.f32.xlu0 %v507
  %v520 = vpop.xlane.xlu0 %519
  %521 = vadd.xlane.f32.xlu0 %v508
  %v522 = vpop.xlane.xlu0 %521
  %523 = vadd.xlane.f32.xlu0 %v509
  %v524 = vpop.xlane.xlu0 %523
  %525 = vadd.xlane.f32.xlu0 %v510
  %v526 = vpop.xlane.xlu0 %525
  %v527 = vmul.f32 %v512, 0.055555556
  %v528 = vmul.f32 %v514, 0.055555556
  %v529 = vmul.f32 %v516, 0.055555556
  %v530 = vmul.f32 %v518, 0.055555556
  %v531 = vmul.f32 %v520, 0.055555556
  %v532 = vmul.f32 %v522, 0.055555556
  %v533 = vmul.f32 %v524, 0.055555556
  %v534 = vmul.f32 %v526, 0.055555556
  %v535 = vmul.f32 %v503, %v503
  %v536 = vmul.f32 %v504, %v504
  %v537 = vmul.f32 %v505, %v505
  %v538 = vmul.f32 %v506, %v506
  %v539 = vmul.f32 %v507, %v507
  %v540 = vmul.f32 %v508, %v508
  %v541 = vmul.f32 %v509, %v509
  %v542 = vmul.f32 %v510, %v510
  %543 = vadd.xlane.f32.xlu0 %v535
  %v544 = vpop.xlane.xlu0 %543
  %545 = vadd.xlane.f32.xlu0 %v536
  %v546 = vpop.xlane.xlu0 %545
  %547 = vadd.xlane.f32.xlu0 %v537
  %v548 = vpop.xlane.xlu0 %547
  %549 = vadd.xlane.f32.xlu0 %v538
  %v550 = vpop.xlane.xlu0 %549
  %551 = vadd.xlane.f32.xlu0 %v539
  %v552 = vpop.xlane.xlu0 %551
  %553 = vadd.xlane.f32.xlu0 %v540
  %v554 = vpop.xlane.xlu0 %553
  %555 = vadd.xlane.f32.xlu0 %v541
  %v556 = vpop.xlane.xlu0 %555
  %557 = vadd.xlane.f32.xlu0 %v542
  %v558 = vpop.xlane.xlu0 %557
  %v559 = vmul.f32 %v544, 0.055555556
  %v560 = vmul.f32 %v546, 0.055555556
  %v561 = vmul.f32 %v548, 0.055555556
  %v562 = vmul.f32 %v550, 0.055555556
  %v563 = vmul.f32 %v552, 0.055555556
  %v564 = vmul.f32 %v554, 0.055555556
  %v565 = vmul.f32 %v556, 0.055555556
  %v566 = vmul.f32 %v558, 0.055555556
  %v567 = vmul.f32 %v527, %v527
  %v568 = vmul.f32 %v528, %v528
  %v569 = vmul.f32 %v529, %v529
  %v570 = vmul.f32 %v530, %v530
  %v571 = vmul.f32 %v531, %v531
  %v572 = vmul.f32 %v532, %v532
  %v573 = vmul.f32 %v533, %v533
  %v574 = vmul.f32 %v534, %v534
  %v575 = vsub.f32 %v559, %v567
  %v576 = vsub.f32 %v560, %v568
  %v577 = vsub.f32 %v561, %v569
  %v578 = vsub.f32 %v562, %v570
  %v579 = vsub.f32 %v563, %v571
  %v580 = vsub.f32 %v564, %v572
  %v581 = vsub.f32 %v565, %v573
  %v582 = vsub.f32 %v566, %v574
  %v583 = vmax.f32 %v575, 0.0
  %v584 = vmax.f32 %v576, 0.0
  %v585 = vmax.f32 %v577, 0.0
  %v586 = vmax.f32 %v578, 0.0
  %v587 = vmax.f32 %v579, 0.0
  %v588 = vmax.f32 %v580, 0.0
  %v589 = vmax.f32 %v581, 0.0
  %v590 = vmax.f32 %v582, 0.0
  %v591 = vld [vmem:[%s2] sm:$0xff]
  %v592 = vld [vmem:[%s2 + $0x8] sm:$0xff]
  %v593 = vld [vmem:[%s2 + $0x10] sm:$0xff]
  %v594 = vld [vmem:[%s2 + $0x18] sm:$0xff]
  %v595 = vld [vmem:[%s2 + $0x20] sm:$0xff]
  %v596 = vld [vmem:[%s2 + $0x28] sm:$0xff]
  %v597 = vld [vmem:[%s2 + $0x30] sm:$0xff]
  %v598 = vld [vmem:[%s2 + $0x38] sm:$0xff]
  %v599 = vadd.f32 %v583, 1e-05
  %v600 = vadd.f32 %v584, 1e-05
  %v601 = vadd.f32 %v585, 1e-05
  %v602 = vadd.f32 %v586, 1e-05
  %v603 = vadd.f32 %v587, 1e-05
  %v604 = vadd.f32 %v588, 1e-05
  %v605 = vadd.f32 %v589, 1e-05
  %v606 = vadd.f32 %v590, 1e-05
  %v607 = vrsqrt.pop %v599
  %v608 = vrsqrt.pop %v600
  %v609 = vrsqrt.pop %v601
  %v610 = vrsqrt.pop %v602
  %v611 = vrsqrt.pop %v603
  %v612 = vrsqrt.pop %v604
  %v613 = vrsqrt.pop %v605
  %v614 = vrsqrt.pop %v606
  %v615 = vmul.f32 %v591, %v607
  %v616 = vmul.f32 %v592, %v608
  %v617 = vmul.f32 %v593, %v609
  %v618 = vmul.f32 %v594, %v610
  %v619 = vmul.f32 %v595, %v611
  %v620 = vmul.f32 %v596, %v612
  %v621 = vmul.f32 %v597, %v613
  %v622 = vmul.f32 %v598, %v614
  %v623 = vsub.f32 %v470, %v527
  %v624 = vsub.f32 %v473, %v528
  %v625 = vsub.f32 %v478, %v529
  %v626 = vsub.f32 %v481, %v530
  %v627 = vsub.f32 %v486, %v531
  %v628 = vsub.f32 %v489, %v532
  %v629 = vsub.f32 %v494, %v533
  %v630 = vsub.f32 %v497, %v534
  %632 = vset.pattern.permute.xlu0 0
  %633 = vperm.xlu0 %632, %v615
  %v634 = vpop.permute.xlu0 %633
  %637 = vset.pattern.permute.xlu0 0
  %638 = vperm.xlu0 %637, %v616
  %v639 = vpop.permute.xlu0 %638
  %642 = vset.pattern.permute.xlu0 0
  %643 = vperm.xlu0 %642, %v617
  %v644 = vpop.permute.xlu0 %643
  %647 = vset.pattern.permute.xlu0 0
  %648 = vperm.xlu0 %647, %v618
  %v649 = vpop.permute.xlu0 %648
  %652 = vset.pattern.permute.xlu0 0
  %653 = vperm.xlu0 %652, %v619
  %v654 = vpop.permute.xlu0 %653
  %657 = vset.pattern.permute.xlu0 0
  %658 = vperm.xlu0 %657, %v620
  %v659 = vpop.permute.xlu0 %658
  %662 = vset.pattern.permute.xlu0 0
  %663 = vperm.xlu0 %662, %v621
  %v664 = vpop.permute.xlu0 %663
  %667 = vset.pattern.permute.xlu0 0
  %668 = vperm.xlu0 %667, %v622
  %v669 = vpop.permute.xlu0 %668
  %v671 = vmul.f32 %v623, %v634
  %v672 = vmul.f32 %v624, %v639
  %v673 = vmul.f32 %v625, %v644
  %v674 = vmul.f32 %v626, %v649
  %v675 = vmul.f32 %v627, %v654
  %v676 = vmul.f32 %v628, %v659
  %v677 = vmul.f32 %v629, %v664
  %v678 = vmul.f32 %v630, %v669
  %v679 = vld [vmem:[%s3] sm:$0xff]
  %v680 = vld [vmem:[%s3 + $0x8] sm:$0xff]
  %v681 = vld [vmem:[%s3 + $0x10] sm:$0xff]
  %v682 = vld [vmem:[%s3 + $0x18] sm:$0xff]
  %v683 = vld [vmem:[%s3 + $0x20] sm:$0xff]
  %v684 = vld [vmem:[%s3 + $0x28] sm:$0xff]
  %v685 = vld [vmem:[%s3 + $0x30] sm:$0xff]
  %v686 = vld [vmem:[%s3 + $0x38] sm:$0xff]
  %688 = vset.pattern.permute.xlu0 0
  %689 = vperm.xlu0 %688, %v679
  %v690 = vpop.permute.xlu0 %689
  %693 = vset.pattern.permute.xlu0 0
  %694 = vperm.xlu0 %693, %v680
  %v695 = vpop.permute.xlu0 %694
  %698 = vset.pattern.permute.xlu0 0
  %699 = vperm.xlu0 %698, %v681
  %v700 = vpop.permute.xlu0 %699
  %703 = vset.pattern.permute.xlu0 0
  %704 = vperm.xlu0 %703, %v682
  %v705 = vpop.permute.xlu0 %704
  %708 = vset.pattern.permute.xlu0 0
  %709 = vperm.xlu0 %708, %v683
  %v710 = vpop.permute.xlu0 %709
  %713 = vset.pattern.permute.xlu0 0
  %714 = vperm.xlu0 %713, %v684
  %v715 = vpop.permute.xlu0 %714
  %718 = vset.pattern.permute.xlu0 0
  %719 = vperm.xlu0 %718, %v685
  %v720 = vpop.permute.xlu0 %719
  %723 = vset.pattern.permute.xlu0 0
  %724 = vperm.xlu0 %723, %v686
  %v725 = vpop.permute.xlu0 %724
  %v727 = vadd.f32 %v671, %v690
  %v728 = vadd.f32 %v672, %v695
  %v729 = vadd.f32 %v673, %v700
  %v730 = vadd.f32 %v674, %v705
  %v731 = vadd.f32 %v675, %v710
  %v732 = vadd.f32 %v676, %v715
  %v733 = vadd.f32 %v677, %v720
  %v734 = vadd.f32 %v678, %v725
  %vm735 = vcmp.ge.f32.partialorder %v727, 0.0
  %vm736 = vcmp.ge.f32.partialorder %v728, 0.0
  %vm737 = vcmp.ge.f32.partialorder %v729, 0.0
  %vm738 = vcmp.ge.f32.partialorder %v730, 0.0
  %vm739 = vcmp.ge.f32.partialorder %v731, 0.0
  %vm740 = vcmp.ge.f32.partialorder %v732, 0.0
  %vm741 = vcmp.ge.f32.partialorder %v733, 0.0
  %vm742 = vcmp.ge.f32.partialorder %v734, 0.0
  %v743 = vmul.f32 %v727, 0.2
  %v744 = vmul.f32 %v728, 0.2
  %v745 = vmul.f32 %v729, 0.2
  %v746 = vmul.f32 %v730, 0.2
  %v747 = vmul.f32 %v731, 0.2
  %v748 = vmul.f32 %v732, 0.2
  %v749 = vmul.f32 %v733, 0.2
  %v750 = vmul.f32 %v734, 0.2
  %v751 = vsel %vm735, %v727, %v743
  %v752 = vsel %vm736, %v728, %v744
  %v753 = vsel %vm737, %v729, %v745
  %v754 = vsel %vm738, %v730, %v746
  %v755 = vsel %vm739, %v731, %v747
  %v756 = vsel %vm740, %v732, %v748
  %v757 = vsel %vm741, %v733, %v749
  %v758 = vsel %vm742, %v734, %v750
  %v759 = vpack.c.bf16 %v752, %v751
  %v760 = vpack.c.bf16 %v754, %v753
  %v761 = vpack.c.bf16 %v756, %v755
  %v762 = vpack.c.bf16 %v758, %v757
  %v767 = vunpack.c.l.b16 %v759
  %v768 = vunpack.c.h.b16 %v759
  %v769 = vunpack.c.l.b16 %v760
  %v770 = vunpack.c.h.b16 %v760
  %v771 = vunpack.c.l.b16 %v761
  %v772 = vunpack.c.h.b16 %v761
  %v773 = vunpack.c.l.b16 %v762
  %v774 = vunpack.c.h.b16 %v762
  %v775 = vpack.c.b16 %v767, %v767
  %v776 = vpack.c.b16 %v768, %v768
  %v777 = vpack.c.b16 %v769, %v769
  %v778 = vpack.c.b16 %v770, %v770
  %v779 = vpack.c.b16 %v771, %v771
  %v780 = vpack.c.b16 %v772, %v772
  %v781 = vpack.c.b16 %v773, %v773
  %v782 = vpack.c.b16 %v774, %v774
  %791 = vst [vmem:[%s4] sm:$0xf] %v775
  %792 = vst [vmem:[%s4 + $0x4] sm:$0xf] %v776
  %793 = vst [vmem:[%s4 + $0x8] sm:$0xf] %v777
  %794 = vst [vmem:[%s4 + $0xc] sm:$0xf] %v778
  %795 = vst [vmem:[%s4 + $0x10] sm:$0xf] %v779
  %796 = vst [vmem:[%s4 + $0x14] sm:$0xf] %v780
  %797 = vst [vmem:[%s4 + $0x18] sm:$0xf] %v781
  %798 = vst [vmem:[%s4 + $0x1c] sm:$0xf] %v782
  // Predicated region
  $region18: #{discriminator_forward.8} parent=0 // pred_check
    _
  $region19: #{discriminator_forward.8} parent=0 // pred_check_branch
    %800 = sbr.rel (0) target = $region21
  $region20: #{discriminator_forward.8} parent=0 // pred_region
    _
  $region21: #{discriminator_forward.8} parent=0 // pred_fallthru
    _
  // Predicated region
  $region22: #{discriminator_forward.8} parent=0 // pred_check
    _
  $region23: #{discriminator_forward.8} parent=0 // pred_check_branch
    %802 = sbr.rel (0) target = $region25
  $region24: #{discriminator_forward.8} parent=0 // pred_region
    _
  $region25: #{discriminator_forward.8} parent=0 // pred_fallthru
    _

// kernel: discriminator_forward.9
$region0: #{discriminator_forward.9}
  #allocation0 [shape = 'u32[]', space=smem, size = 0x4, offset = 0x4, fixed_abs, tag = 'smem constant byte address 0x4 - core index']
  #allocation1 [shape = 'u32[144,128]{1,0:T(1,128)}', space=vmem, size = 0x12000, scoped, tag = 'internal scratch']
  %s0 = inlined_call_operand.vmem [shape: bf16[1024,128], index: 0, kind: input, shape index: {}]
  %s1 = inlined_call_operand.vmem [shape: bf16[16,1024], index: 1, kind: input, shape index: {}]
  %s2 = inlined_call_operand.vmem [shape: f32[16,1], index: 2, kind: input, shape index: {}]
  %s3 = inlined_call_operand.vmem [shape: f32[16,128], index: 3, kind: output, shape index: {}]
  %s4 = sld [smem:[#allocation0]]
  $region22: #{discriminator_forward.9} parent=0
    _
  %s6 = ssub.s32 1, %s4
  %s7 = scalar_select 0, %s6, %s4
  // Predicated region
  $region2: #{discriminator_forward.9} parent=0 // pred_check
    _
  $region3: #{discriminator_forward.9} parent=0 // pred_check_branch
    %9 = sbr.rel (0) target = $region5
  $region4: #{discriminator_forward.9} parent=0 // pred_region
    _
  $region5: #{discriminator_forward.9} parent=0 // pred_fallthru
    _
  // Predicated region
  $region6: #{discriminator_forward.9} parent=0 // pred_check
    _
  $region7: #{discriminator_forward.9} parent=0 // pred_check_branch
    %11 = sbr.rel (0) target = $region9
  $region8: #{discriminator_forward.9} parent=0 // pred_region
    _
  $region9: #{discriminator_forward.9} parent=0 // pred_fallthru
    _
  // Predicated region
  $region10: #{discriminator_forward.9} parent=0 // pred_check
    _
  $region11: #{discriminator_forward.9} parent=0 // pred_check_branch
    %13 = sbr.rel (0) target = $region13
  $region12: #{discriminator_forward.9} parent=0 // pred_region
    _
  $region13: #{discriminator_forward.9} parent=0 // pred_fallthru
    _
  %v15 = vld [vmem:[%s1] sm:$0xff]
  %v16 = vld [vmem:[%s1 + $0x8] sm:$0xff]
  %v17 = vld [vmem:[%s1 + $0x10] sm:$0xff]
  %v18 = vld [vmem:[%s1 + $0x18] sm:$0xff]
  %v19 = vld [vmem:[%s1 + $0x20] sm:$0xff]
  %v20 = vld [vmem:[%s1 + $0x28] sm:$0xff]
  %v21 = vld [vmem:[%s1 + $0x30] sm:$0xff]
  %v22 = vld [vmem:[%s1 + $0x38] sm:$0xff]
  %v23 = vld [vmem:[%s0] sm:$0xf]
  %v24 = vld [vmem:[%s0 + $0x4] sm:$0xf]
  %v25 = vld [vmem:[%s0 + $0x8] sm:$0xf]
  %v26 = vld [vmem:[%s0 + $0xc] sm:$0xf]
  %v27 = vld [vmem:[%s0 + $0x10] sm:$0xf]
  %v28 = vld [vmem:[%s0 + $0x14] sm:$0xf]
  %v29 = vld [vmem:[%s0 + $0x18] sm:$0xf]
  %v30 = vld [vmem:[%s0 + $0x1c] sm:$0xf]
  %v31 = vld [vmem:[%s0 + $0x20] sm:$0xf]
  %v32 = vld [vmem:[%s0 + $0x24] sm:$0xf]
  %v33 = vld [vmem:[%s0 + $0x28] sm:$0xf]
  %v34 = vld [vmem:[%s0 + $0x2c] sm:$0xf]
  %v35 = vld [vmem:[%s0 + $0x30] sm:$0xf]
  %v36 = vld [vmem:[%s0 + $0x34] sm:$0xf]
  %v37 = vld [vmem:[%s0 + $0x38] sm:$0xf]
  %v38 = vld [vmem:[%s0 + $0x3c] sm:$0xf]
  %v39 = vld [vmem:[%s0 + $0x40] sm:$0xf]
  %v40 = vld [vmem:[%s0 + $0x44] sm:$0xf]
  %v41 = vld [vmem:[%s0 + $0x48] sm:$0xf]
  %v42 = vld [vmem:[%s0 + $0x4c] sm:$0xf]
  %v43 = vld [vmem:[%s0 + $0x50] sm:$0xf]
  %v44 = vld [vmem:[%s0 + $0x54] sm:$0xf]
  %v45 = vld [vmem:[%s0 + $0x58] sm:$0xf]
  %v46 = vld [vmem:[%s0 + $0x5c] sm:$0xf]
  %v47 = vld [vmem:[%s0 + $0x60] sm:$0xf]
  %v48 = vld [vmem:[%s0 + $0x64] sm:$0xf]
  %v49 = vld [vmem:[%s0 + $0x68] sm:$0xf]
  %v50 = vld [vmem:[%s0 + $0x6c] sm:$0xf]
  %v51 = vld [vmem:[%s0 + $0x70] sm:$0xf]
  %v52 = vld [vmem:[%s0 + $0x74] sm:$0xf]
  %v53 = vld [vmem:[%s0 + $0x78] sm:$0xf]
  %v54 = vld [vmem:[%s0 + $0x7c] sm:$0xf]
  %v55 = vld [vmem:[%s0 + $0x80] sm:$0xf]
  %v56 = vld [vmem:[%s0 + $0x84] sm:$0xf]
  %v57 = vld [vmem:[%s0 + $0x88] sm:$0xf]
  %v58 = vld [vmem:[%s0 + $0x8c] sm:$0xf]
  %v59 = vld [vmem:[%s0 + $0x90] sm:$0xf]
  %v60 = vld [vmem:[%s0 + $0x94] sm:$0xf]
  %v61 = vld [vmem:[%s0 + $0x98] sm:$0xf]
  %v62 = vld [vmem:[%s0 + $0x9c] sm:$0xf]
  %v63 = vld [vmem:[%s0 + $0xa0] sm:$0xf]
  %v64 = vld [vmem:[%s0 + $0xa4] sm:$0xf]
  %v65 = vld [vmem:[%s0 + $0xa8] sm:$0xf]
  %v66 = vld [vmem:[%s0 + $0xac] sm:$0xf]
  %v67 = vld [vmem:[%s0 + $0xb0] sm:$0xf]
  %v68 = vld [vmem:[%s0 + $0xb4] sm:$0xf]
  %v69 = vld [vmem:[%s0 + $0xb8] sm:$0xf]
  %v70 = vld [vmem:[%s0 + $0xbc] sm:$0xf]
  %v71 = vld [vmem:[%s0 + $0xc0] sm:$0xf]
  %v72 = vld [vmem:[%s0 + $0xc4] sm:$0xf]
  %v73 = vld [vmem:[%s0 + $0xc8] sm:$0xf]
  %v74 = vld [vmem:[%s0 + $0xcc] sm:$0xf]
  %v75 = vld [vmem:[%s0 + $0xd0] sm:$0xf]
  %v76 = vld [vmem:[%s0 + $0xd4] sm:$0xf]
  %v77 = vld [vmem:[%s0 + $0xd8] sm:$0xf]
  %v78 = vld [vmem:[%s0 + $0xdc] sm:$0xf]
  %v79 = vld [vmem:[%s0 + $0xe0] sm:$0xf]
  %v80 = vld [vmem:[%s0 + $0xe4] sm:$0xf]
  %v81 = vld [vmem:[%s0 + $0xe8] sm:$0xf]
  %v82 = vld [vmem:[%s0 + $0xec] sm:$0xf]
  %v83 = vld [vmem:[%s0 + $0xf0] sm:$0xf]
  %v84 = vld [vmem:[%s0 + $0xf4] sm:$0xf]
  %v85 = vld [vmem:[%s0 + $0xf8] sm:$0xf]
  %v86 = vld [vmem:[%s0 + $0xfc] sm:$0xf]
  %v87 = vld [vmem:[%s0 + $0x100] sm:$0xf]
  %v88 = vld [vmem:[%s0 + $0x104] sm:$0xf]
  %v89 = vld [vmem:[%s0 + $0x108] sm:$0xf]
  %v90 = vld [vmem:[%s0 + $0x10c] sm:$0xf]
  %v91 = vld [vmem:[%s0 + $0x110] sm:$0xf]
  %v92 = vld [vmem:[%s0 + $0x114] sm:$0xf]
  %v93 = vld [vmem:[%s0 + $0x118] sm:$0xf]
  %v94 = vld [vmem:[%s0 + $0x11c] sm:$0xf]
  %v95 = vld [vmem:[%s0 + $0x120] sm:$0xf]
  %v96 = vld [vmem:[%s0 + $0x124] sm:$0xf]
  %v97 = vld [vmem:[%s0 + $0x128] sm:$0xf]
  %v98 = vld [vmem:[%s0 + $0x12c] sm:$0xf]
  %v99 = vld [vmem:[%s0 + $0x130] sm:$0xf]
  %v100 = vld [vmem:[%s0 + $0x134] sm:$0xf]
  %v101 = vld [vmem:[%s0 + $0x138] sm:$0xf]
  %v102 = vld [vmem:[%s0 + $0x13c] sm:$0xf]
  %v103 = vld [vmem:[%s0 + $0x140] sm:$0xf]
  %v104 = vld [vmem:[%s0 + $0x144] sm:$0xf]
  %v105 = vld [vmem:[%s0 + $0x148] sm:$0xf]
  %v106 = vld [vmem:[%s0 + $0x14c] sm:$0xf]
  %v107 = vld [vmem:[%s0 + $0x150] sm:$0xf]
  %v108 = vld [vmem:[%s0 + $0x154] sm:$0xf]
  %v109 = vld [vmem:[%s0 + $0x158] sm:$0xf]
  %v110 = vld [vmem:[%s0 + $0x15c] sm:$0xf]
  %v111 = vld [vmem:[%s0 + $0x160] sm:$0xf]
  %v112 = vld [vmem:[%s0 + $0x164] sm:$0xf]
  %v113 = vld [vmem:[%s0 + $0x168] sm:$0xf]
  %v114 = vld [vmem:[%s0 + $0x16c] sm:$0xf]
  %v115 = vld [vmem:[%s0 + $0x170] sm:$0xf]
  %v116 = vld [vmem:[%s0 + $0x174] sm:$0xf]
  %v117 = vld [vmem:[%s0 + $0x178] sm:$0xf]
  %v118 = vld [vmem:[%s0 + $0x17c] sm:$0xf]
  %v119 = vld [vmem:[%s0 + $0x180] sm:$0xf]
  %v120 = vld [vmem:[%s0 + $0x184] sm:$0xf]
  %v121 = vld [vmem:[%s0 + $0x188] sm:$0xf]
  %v122 = vld [vmem:[%s0 + $0x18c] sm:$0xf]
  %v123 = vld [vmem:[%s0 + $0x190] sm:$0xf]
  %v124 = vld [vmem:[%s0 + $0x194] sm:$0xf]
  %v125 = vld [vmem:[%s0 + $0x198] sm:$0xf]
  %v126 = vld [vmem:[%s0 + $0x19c] sm:$0xf]
  %v127 = vld [vmem:[%s0 + $0x1a0] sm:$0xf]
  %v128 = vld [vmem:[%s0 + $0x1a4] sm:$0xf]
  %v129 = vld [vmem:[%s0 + $0x1a8] sm:$0xf]
  %v130 = vld [vmem:[%s0 + $0x1ac] sm:$0xf]
  %v131 = vld [vmem:[%s0 + $0x1b0] sm:$0xf]
  %v132 = vld [vmem:[%s0 + $0x1b4] sm:$0xf]
  %v133 = vld [vmem:[%s0 + $0x1b8] sm:$0xf]
  %v134 = vld [vmem:[%s0 + $0x1bc] sm:$0xf]
  %v135 = vld [vmem:[%s0 + $0x1c0] sm:$0xf]
  %v136 = vld [vmem:[%s0 + $0x1c4] sm:$0xf]
  %v137 = vld [vmem:[%s0 + $0x1c8] sm:$0xf]
  %v138 = vld [vmem:[%s0 + $0x1cc] sm:$0xf]
  %v139 = vld [vmem:[%s0 + $0x1d0] sm:$0xf]
  %v140 = vld [vmem:[%s0 + $0x1d4] sm:$0xf]
  %v141 = vld [vmem:[%s0 + $0x1d8] sm:$0xf]
  %v142 = vld [vmem:[%s0 + $0x1dc] sm:$0xf]
  %v143 = vld [vmem:[%s0 + $0x1e0] sm:$0xf]
  %v144 = vld [vmem:[%s0 + $0x1e4] sm:$0xf]
  %v145 = vld [vmem:[%s0 + $0x1e8] sm:$0xf]
  %v146 = vld [vmem:[%s0 + $0x1ec] sm:$0xf]
  %v147 = vld [vmem:[%s0 + $0x1f0] sm:$0xf]
  %v148 = vld [vmem:[%s0 + $0x1f4] sm:$0xf]
  %v149 = vld [vmem:[%s0 + $0x1f8] sm:$0xf]
  %v150 = vld [vmem:[%s0 + $0x1fc] sm:$0xf]
  %v151 = vld [vmem:[%s2] sm:$0xff]
  %v152 = vld [vmem:[%s2 + $0x8] sm:$0xff]
  %154 = vset.pattern.permute.xlu0 0
  %155 = vperm.xlu0 %154, %v151
  %v156 = vpop.permute.xlu0 %155
  %159 = vset.pattern.permute.xlu0 0
  %160 = vperm.xlu0 %159, %v152
  %v161 = vpop.permute.xlu0 %160
  %v171 = vunpack.c.l.b16 %v15
  %v172 = vunpack.c.h.b16 %v15
  %v173 = vunpack.c.l.b16 %v16
  %v174 = vunpack.c.h.b16 %v16
  %v175 = vunpack.c.l.b16 %v17
  %v176 = vunpack.c.h.b16 %v17
  %v177 = vunpack.c.l.b16 %v18
  %v178 = vunpack.c.h.b16 %v18
  %v179 = vunpack.c.l.b16 %v19
  %v180 = vunpack.c.h.b16 %v19
  %v181 = vunpack.c.l.b16 %v20
  %v182 = vunpack.c.h.b16 %v20
  %v183 = vunpack.c.l.b16 %v21
  %v184 = vunpack.c.h.b16 %v21
  %v185 = vunpack.c.l.b16 %v22
  %v186 = vunpack.c.h.b16 %v22
  %v187 = vpack.c.b16 %v179, %v171
  %v188 = vpack.c.b16 %v180, %v172
  %v189 = vpack.c.b16 %v181, %v173
  %v190 = vpack.c.b16 %v182, %v174
  %v191 = vpack.c.b16 %v183, %v175
  %v192 = vpack.c.b16 %v184, %v176
  %v193 = vpack.c.b16 %v185, %v177
  %v194 = vpack.c.b16 %v186, %v178
  %v331 = vunpack.c.l.b16 %v23
  %v332 = vunpack.c.l.b16 %v24
  %v333 = vunpack.c.l.b16 %v25
  %v334 = vunpack.c.l.b16 %v26
  %v335 = vunpack.c.l.b16 %v27
  %v336 = vunpack.c.l.b16 %v28
  %v337 = vunpack.c.l.b16 %v29
  %v338 = vunpack.c.l.b16 %v30
  %v339 = vunpack.c.l.b16 %v31
  %v340 = vunpack.c.l.b16 %v32
  %v341 = vunpack.c.l.b16 %v33
  %v342 = vunpack.c.l.b16 %v34
  %v343 = vunpack.c.l.b16 %v35
  %v344 = vunpack.c.l.b16 %v36
  %v345 = vunpack.c.l.b16 %v37
  %v346 = vunpack.c.l.b16 %v38
  %v347 = vunpack.c.l.b16 %v39
  %v348 = vunpack.c.l.b16 %v40
  %v349 = vunpack.c.l.b16 %v41
  %v350 = vunpack.c.l.b16 %v42
  %v351 = vunpack.c.l.b16 %v43
  %v352 = vunpack.c.l.b16 %v44
  %v353 = vunpack.c.l.b16 %v45
  %v354 = vunpack.c.l.b16 %v46
  %v355 = vunpack.c.l.b16 %v47
  %v356 = vunpack.c.l.b16 %v48
  %v357 = vunpack.c.l.b16 %v49
  %v358 = vunpack.c.l.b16 %v50
  %v359 = vunpack.c.l.b16 %v51
  %v360 = vunpack.c.l.b16 %v52
  %v361 = vunpack.c.l.b16 %v53
  %v362 = vunpack.c.l.b16 %v54
  %v363 = vunpack.c.l.b16 %v55
  %v364 = vunpack.c.l.b16 %v56
  %v365 = vunpack.c.l.b16 %v57
  %v366 = vunpack.c.l.b16 %v58
  %v367 = vunpack.c.l.b16 %v59
  %v368 = vunpack.c.l.b16 %v60
  %v369 = vunpack.c.l.b16 %v61
  %v370 = vunpack.c.l.b16 %v62
  %v371 = vunpack.c.l.b16 %v63
  %v372 = vunpack.c.l.b16 %v64
  %v373 = vunpack.c.l.b16 %v65
  %v374 = vunpack.c.l.b16 %v66
  %v375 = vunpack.c.l.b16 %v67
  %v376 = vunpack.c.l.b16 %v68
  %v377 = vunpack.c.l.b16 %v69
  %v378 = vunpack.c.l.b16 %v70
  %v379 = vunpack.c.l.b16 %v71
  %v380 = vunpack.c.l.b16 %v72
  %v381 = vunpack.c.l.b16 %v73
  %v382 = vunpack.c.l.b16 %v74
  %v383 = vunpack.c.l.b16 %v75
  %v384 = vunpack.c.l.b16 %v76
  %v385 = vunpack.c.l.b16 %v77
  %v386 = vunpack.c.l.b16 %v78
  %v387 = vunpack.c.l.b16 %v79
  %v388 = vunpack.c.l.b16 %v80
  %v389 = vunpack.c.l.b16 %v81
  %v390 = vunpack.c.l.b16 %v82
  %v391 = vunpack.c.l.b16 %v83
  %v392 = vunpack.c.l.b16 %v84
  %v393 = vunpack.c.l.b16 %v85
  %v394 = vunpack.c.l.b16 %v86
  %v395 = vunpack.c.l.b16 %v87
  %v396 = vunpack.c.l.b16 %v88
  %v397 = vunpack.c.l.b16 %v89
  %v398 = vunpack.c.l.b16 %v90
  %v399 = vunpack.c.l.b16 %v91
  %v400 = vunpack.c.l.b16 %v92
  %v401 = vunpack.c.l.b16 %v93
  %v402 = vunpack.c.l.b16 %v94
  %v403 = vunpack.c.l.b16 %v95
  %v404 = vunpack.c.l.b16 %v96
  %v405 = vunpack.c.l.b16 %v97
  %v406 = vunpack.c.l.b16 %v98
  %v407 = vunpack.c.l.b16 %v99
  %v408 = vunpack.c.l.b16 %v100
  %v409 = vunpack.c.l.b16 %v101
  %v410 = vunpack.c.l.b16 %v102
  %v411 = vunpack.c.l.b16 %v103
  %v412 = vunpack.c.l.b16 %v104
  %v413 = vunpack.c.l.b16 %v105
  %v414 = vunpack.c.l.b16 %v106
  %v415 = vunpack.c.l.b16 %v107
  %v416 = vunpack.c.l.b16 %v108
  %v417 = vunpack.c.l.b16 %v109
  %v418 = vunpack.c.l.b16 %v110
  %v419 = vunpack.c.l.b16 %v111
  %v420 = vunpack.c.l.b16 %v112
  %v421 = vunpack.c.l.b16 %v113
  %v422 = vunpack.c.l.b16 %v114
  %v423 = vunpack.c.l.b16 %v115
  %v424 = vunpack.c.l.b16 %v116
  %v425 = vunpack.c.l.b16 %v117
  %v426 = vunpack.c.l.b16 %v118
  %v427 = vunpack.c.l.b16 %v119
  %v428 = vunpack.c.l.b16 %v120
  %v429 = vunpack.c.l.b16 %v121
  %v430 = vunpack.c.l.b16 %v122
  %v431 = vunpack.c.l.b16 %v123
  %v432 = vunpack.c.l.b16 %v124
  %v433 = vunpack.c.l.b16 %v125
  %v434 = vunpack.c.l.b16 %v126
  %v435 = vunpack.c.l.b16 %v127
  %v436 = vunpack.c.l.b16 %v128
  %v437 = vunpack.c.l.b16 %v129
  %v438 = vunpack.c.l.b16 %v130
  %v439 = vunpack.c.l.b16 %v131
  %v440 = vunpack.c.l.b16 %v132
  %v441 = vunpack.c.l.b16 %v133
  %v442 = vunpack.c.l.b16 %v134
  %v443 = vunpack.c.l.b16 %v135
  %v444 = vunpack.c.l.b16 %v136
  %v445 = vunpack.c.l.b16 %v137
  %v446 = vunpack.c.l.b16 %v138
  %v447 = vunpack.c.l.b16 %v139
  %v448 = vunpack.c.l.b16 %v140
  %v449 = vunpack.c.l.b16 %v141
  %v450 = vunpack.c.l.b16 %v142
  %v451 = vunpack.c.l.b16 %v143
  %v452 = vunpack.c.l.b16 %v144
  %v453 = vunpack.c.l.b16 %v145
  %v454 = vunpack.c.l.b16 %v146
  %v455 = vunpack.c.l.b16 %v147
  %v456 = vunpack.c.l.b16 %v148
  %v457 = vunpack.c.l.b16 %v149
  %v458 = vunpack.c.l.b16 %v150
  %v459 = vpack.c.b16 %v332, %v331
  %v460 = vpack.c.b16 %v334, %v333
  %v461 = vpack.c.b16 %v336, %v335
  %v462 = vpack.c.b16 %v338, %v337
  %v463 = vpack.c.b16 %v340, %v339
  %v464 = vpack.c.b16 %v342, %v341
  %v465 = vpack.c.b16 %v344, %v343
  %v466 = vpack.c.b16 %v346, %v345
  %v467 = vpack.c.b16 %v348, %v347
  %v468 = vpack.c.b16 %v350, %v349
  %v469 = vpack.c.b16 %v352, %v351
  %v470 = vpack.c.b16 %v354, %v353
  %v471 = vpack.c.b16 %v356, %v355
  %v472 = vpack.c.b16 %v358, %v357
  %v473 = vpack.c.b16 %v360, %v359
  %v474 = vpack.c.b16 %v362, %v361
  %v475 = vpack.c.b16 %v364, %v363
  %v476 = vpack.c.b16 %v366, %v365
  %v477 = vpack.c.b16 %v368, %v367
  %v478 = vpack.c.b16 %v370, %v369
  %v479 = vpack.c.b16 %v372, %v371
  %v480 = vpack.c.b16 %v374, %v373
  %v481 = vpack.c.b16 %v376, %v375
  %v482 = vpack.c.b16 %v378, %v377
  %v483 = vpack.c.b16 %v380, %v379
  %v484 = vpack.c.b16 %v382, %v381
  %v485 = vpack.c.b16 %v384, %v383
  %v486 = vpack.c.b16 %v386, %v385
  %v487 = vpack.c.b16 %v388, %v387
  %v488 = vpack.c.b16 %v390, %v389
  %v489 = vpack.c.b16 %v392, %v391
  %v490 = vpack.c.b16 %v394, %v393
  %v491 = vpack.c.b16 %v396, %v395
  %v492 = vpack.c.b16 %v398, %v397
  %v493 = vpack.c.b16 %v400, %v399
  %v494 = vpack.c.b16 %v402, %v401
  %v495 = vpack.c.b16 %v404, %v403
  %v496 = vpack.c.b16 %v406, %v405
  %v497 = vpack.c.b16 %v408, %v407
  %v498 = vpack.c.b16 %v410, %v409
  %v499 = vpack.c.b16 %v412, %v411
  %v500 = vpack.c.b16 %v414, %v413
  %v501 = vpack.c.b16 %v416, %v415
  %v502 = vpack.c.b16 %v418, %v417
  %v503 = vpack.c.b16 %v420, %v419
  %v504 = vpack.c.b16 %v422, %v421
  %v505 = vpack.c.b16 %v424, %v423
  %v506 = vpack.c.b16 %v426, %v425
  %v507 = vpack.c.b16 %v428, %v427
  %v508 = vpack.c.b16 %v430, %v429
  %v509 = vpack.c.b16 %v432, %v431
  %v510 = vpack.c.b16 %v434, %v433
  %v511 = vpack.c.b16 %v436, %v435
  %v512 = vpack.c.b16 %v438, %v437
  %v513 = vpack.c.b16 %v440, %v439
  %v514 = vpack.c.b16 %v442, %v441
  %v515 = vpack.c.b16 %v444, %v443
  %v516 = vpack.c.b16 %v446, %v445
  %v517 = vpack.c.b16 %v448, %v447
  %v518 = vpack.c.b16 %v450, %v449
  %v519 = vpack.c.b16 %v452, %v451
  %v520 = vpack.c.b16 %v454, %v453
  %v521 = vpack.c.b16 %v456, %v455
  %v522 = vpack.c.b16 %v458, %v457
  %587 = vmatprep.subr.bf16.mxu0 0
  %588 = vmatpush1.bf16.msra.mxu0 %v459
  %589 = vmatprep.subr.bf16.mxu0 0
  %590 = vmatpush1.bf16.msra.mxu0 %v460
  %591 = vmatprep.subr.bf16.mxu0 0
  %592 = vmatpush1.bf16.msra.mxu0 %v461
  %593 = vmatprep.subr.bf16.mxu0 0
  %594 = vmatpush1.bf16.msra.mxu0 %v462
  %595 = vmatprep.subr.bf16.mxu0 0
  %596 = vmatpush1.bf16.msra.mxu0 %v463
  %597 = vmatprep.subr.bf16.mxu0 0
  %598 = vmatpush1.bf16.msra.mxu0 %v464
  %599 = vmatprep.subr.bf16.mxu0 0
  %600 = vmatpush1.bf16.msra.mxu0 %v465
  %601 = vmatprep.subr.bf16.mxu0 0
  %602 = vmatpush1.bf16.msra.mxu0 %v466
  %603 = vmatprep.subr.bf16.mxu0 0
  %604 = vmatpush1.bf16.msra.mxu0 %v467
  %605 = vmatprep.subr.bf16.mxu0 0
  %606 = vmatpush1.bf16.msra.mxu0 %v468
  %607 = vmatprep.subr.bf16.mxu0 0
  %608 = vmatpush1.bf16.msra.mxu0 %v469
  %609 = vmatprep.subr.bf16.mxu0 0
  %610 = vmatpush1.bf16.msra.mxu0 %v470
  %611 = vmatprep.subr.bf16.mxu0 0
  %612 = vmatpush1.bf16.msra.mxu0 %v471
  %613 = vmatprep.subr.bf16.mxu0 0
  %614 = vmatpush1.bf16.msra.mxu0 %v472
  %615 = vmatprep.subr.bf16.mxu0 0
  %616 = vmatpush1.bf16.msra.mxu0 %v473
  %617 = vmatprep.subr.bf16.mxu0 0
  %618 = vmatpush1.bf16.msra.mxu0 %v474
  %619 = vmatprep.mubr.bf16.mxu0 %v188
  %620 = vmatmul.mubr.bf16.gmra.mrb[0].mxu0 %v187
  %v621 = vpop.f32.mrb[0].mxu0
  %v622 = vadd.f32 %v156, %v621
  %v623 = vpop.f32.mrb[0].mxu0
  %v624 = vpop.f32.mrb[0].mxu0
  %v625 = vadd.f32 %v161, %v624
  %v626 = vpop.f32.mrb[0].mxu0
  %627 = vdwg.mxu0
  %628 = vmatprep.subr.bf16.mxu0 0
  %629 = vmatpush1.bf16.msra.mxu0 %v475
  %630 = vmatprep.subr.bf16.mxu0 0
  %631 = vmatpush1.bf16.msra.mxu0 %v476
  %632 = vmatprep.subr.bf16.mxu0 0
  %633 = vmatpush1.bf16.msra.mxu0 %v477
  %634 = vmatprep.subr.bf16.mxu0 0
  %635 = vmatpush1.bf16.msra.mxu0 %v478
  %636 = vmatprep.subr.bf16.mxu0 0
  %637 = vmatpush1.bf16.msra.mxu0 %v479
  %638 = vmatprep.subr.bf16.mxu0 0
  %639 = vmatpush1.bf16.msra.mxu0 %v480
  %640 = vmatprep.subr.bf16.mxu0 0
  %641 = vmatpush1.bf16.msra.mxu0 %v481
  %642 = vmatprep.subr.bf16.mxu0 0
  %643 = vmatpush1.bf16.msra.mxu0 %v482
  %644 = vmatprep.subr.bf16.mxu0 0
  %645 = vmatpush1.bf16.msra.mxu0 %v483
  %646 = vmatprep.subr.bf16.mxu0 0
  %647 = vmatpush1.bf16.msra.mxu0 %v484
  %648 = vmatprep.subr.bf16.mxu0 0
  %649 = vmatpush1.bf16.msra.mxu0 %v485
  %650 = vmatprep.subr.bf16.mxu0 0
  %651 = vmatpush1.bf16.msra.mxu0 %v486
  %652 = vmatprep.subr.bf16.mxu0 0
  %653 = vmatpush1.bf16.msra.mxu0 %v487
  %654 = vmatprep.subr.bf16.mxu0 0
  %655 = vmatpush1.bf16.msra.mxu0 %v488
  %656 = vmatprep.subr.bf16.mxu0 0
  %657 = vmatpush1.bf16.msra.mxu0 %v489
  %658 = vmatprep.subr.bf16.mxu0 0
  %659 = vmatpush1.bf16.msra.mxu0 %v490
  %660 = vmatprep.mubr.bf16.mxu0 %v190
  %661 = vmatmul.mubr.bf16.gmra.mrb[0].mxu0 %v189
  %v662 = vpop.f32.mrb[0].mxu0
  %v663 = vadd.f32 %v622, %v662
  %v664 = vpop.f32.mrb[0].mxu0
  %v665 = vpop.f32.mrb[0].mxu0
  %v666 = vadd.f32 %v625, %v665
  %v667 = vpop.f32.mrb[0].mxu0
  %668 = vdwg.mxu0
  %669 = vmatprep.subr.bf16.mxu0 0
  %670 = vmatpush1.bf16.msra.mxu0 %v491
  %671 = vmatprep.subr.bf16.mxu0 0
  %672 = vmatpush1.bf16.msra.mxu0 %v492
  %673 = vmatprep.subr.bf16.mxu0 0
  %674 = vmatpush1.bf16.msra.mxu0 %v493
  %675 = vmatprep.subr.bf16.mxu0 0
  %676 = vmatpush1.bf16.msra.mxu0 %v494
  %677 = vmatprep.subr.bf16.mxu0 0
  %678 = vmatpush1.bf16.msra.mxu0 %v495
  %679 = vmatprep.subr.bf16.mxu0 0
  %680 = vmatpush1.bf16.msra.mxu0 %v496
  %681 = vmatprep.subr.bf16.mxu0 0
  %682 = vmatpush1.bf16.msra.mxu0 %v497
  %683 = vmatprep.subr.bf16.mxu0 0
  %684 = vmatpush1.bf16.msra.mxu0 %v498
  %685 = vmatprep.subr.bf16.mxu0 0
  %686 = vmatpush1.bf16.msra.mxu0 %v499
  %687 = vmatprep.subr.bf16.mxu0 0
  %688 = vmatpush1.bf16.msra.mxu0 %v500
  %689 = vmatprep.subr.bf16.mxu0 0
  %690 = vmatpush1.bf16.msra.mxu0 %v501
  %691 = vmatprep.subr.bf16.mxu0 0
  %692 = vmatpush1.bf16.msra.mxu0 %v502
  %693 = vmatprep.subr.bf16.mxu0 0
  %694 = vmatpush1.bf16.msra.mxu0 %v503
  %695 = vmatprep.subr.bf16.mxu0 0
  %696 = vmatpush1.bf16.msra.mxu0 %v504
  %697 = vmatprep.subr.bf16.mxu0 0
  %698 = vmatpush1.bf16.msra.mxu0 %v505
  %699 = vmatprep.subr.bf16.mxu0 0
  %700 = vmatpush1.bf16.msra.mxu0 %v506
  %701 = vmatprep.mubr.bf16.mxu0 %v192
  %702 = vmatmul.mubr.bf16.gmra.mrb[0].mxu0 %v191
  %v703 = vpop.f32.mrb[0].mxu0
  %v704 = vadd.f32 %v663, %v703
  %v705 = vpop.f32.mrb[0].mxu0
  %v706 = vpop.f32.mrb[0].mxu0
  %v707 = vadd.f32 %v666, %v706
  %v708 = vpop.f32.mrb[0].mxu0
  %709 = vdwg.mxu0
  %710 = vmatprep.subr.bf16.mxu0 0
  %711 = vmatpush1.bf16.msra.mxu0 %v507
  %712 = vmatprep.subr.bf16.mxu0 0
  %713 = vmatpush1.bf16.msra.mxu0 %v508
  %714 = vmatprep.subr.bf16.mxu0 0
  %715 = vmatpush1.bf16.msra.mxu0 %v509
  %716 = vmatprep.subr.bf16.mxu0 0
  %717 = vmatpush1.bf16.msra.mxu0 %v510
  %718 = vmatprep.subr.bf16.mxu0 0
  %719 = vmatpush1.bf16.msra.mxu0 %v511
  %720 = vmatprep.subr.bf16.mxu0 0
  %721 = vmatpush1.bf16.msra.mxu0 %v512
  %722 = vmatprep.subr.bf16.mxu0 0
  %723 = vmatpush1.bf16.msra.mxu0 %v513
  %724 = vmatprep.subr.bf16.mxu0 0
  %725 = vmatpush1.bf16.msra.mxu0 %v514
  %726 = vmatprep.subr.bf16.mxu0 0
  %727 = vmatpush1.bf16.msra.mxu0 %v515
  %728 = vmatprep.subr.bf16.mxu0 0
  %729 = vmatpush1.bf16.msra.mxu0 %v516
  %730 = vmatprep.subr.bf16.mxu0 0
  %731 = vmatpush1.bf16.msra.mxu0 %v517
  %732 = vmatprep.subr.bf16.mxu0 0
  %733 = vmatpush1.bf16.msra.mxu0 %v518
  %734 = vmatprep.subr.bf16.mxu0 0
  %735 = vmatpush1.bf16.msra.mxu0 %v519
  %736 = vmatprep.subr.bf16.mxu0 0
  %737 = vmatpush1.bf16.msra.mxu0 %v520
  %738 = vmatprep.subr.bf16.mxu0 0
  %739 = vmatpush1.bf16.msra.mxu0 %v521
  %740 = vmatprep.subr.bf16.mxu0 0
  %741 = vmatpush1.bf16.msra.mxu0 %v522
  %742 = vmatprep.mubr.bf16.mxu0 %v194
  %743 = vmatmul.mubr.bf16.gmra.mrb[0].mxu0 %v193
  %v744 = vpop.f32.mrb[0].mxu0
  %v745 = vadd.f32 %v704, %v744
  %v746 = vpop.f32.mrb[0].mxu0
  %v747 = vpop.f32.mrb[0].mxu0
  %v748 = vadd.f32 %v707, %v747
  %v749 = vpop.f32.mrb[0].mxu0
  %750 = vdwg.mxu0
  %v751 = vand.u32 2147483647, %v745
  %v752 = vand.u32 2147483647, %v748
  %v753 = vsub.f32 0.0, %v751
  %v754 = vsub.f32 0.0, %v752
  %v755 = vmul.f32 %v753, 1.442695
  %v756 = vpow.pop %v755
  %v757 = vmul.f32 %v754, 1.442695
  %v758 = vpow.pop %v757
  %vm759 = vcmp.ge.f32.partialorder %v745, 0.0
  %vm760 = vcmp.ge.f32.partialorder %v748, 0.0
  %v761 = vsel %vm759, 1.0, %v756
  %v762 = vsel %vm760, 1.0, %v758
  %v763 = vadd.f32 %v756, 1.0
  %v764 = vadd.f32 %v758, 1.0
  %v765 = vrcp.pop %v763
  %v766 = vrcp.pop %v764
  %v767 = vmul.f32 %v761, %v765
  %v768 = vmul.f32 %v762, %v766
  %769 = vst [vmem:[%s3] sm:$0xff] %v767
  %770 = vst [vmem:[%s3 + $0x8] sm:$0xff] %v768
  // Predicated region
  $region14: #{discriminator_forward.9} parent=0 // pred_check
    _
  $region15: #{discriminator_forward.9} parent=0 // pred_check_branch
    %772 = sbr.rel (0) target = $region17
  $region16: #{discriminator_forward.9} parent=0 // pred_region
    _
  $region17: #{discriminator_forward.9} parent=0 // pred_fallthru
    _
  // Predicated region
  $region18: #{discriminator_forward.9} parent=0 // pred_check
    _
  $region19: #{discriminator_forward.9} parent=0 // pred_check_branch
    %774 = sbr.rel (0) target = $region21
  $region20: #{discriminator_forward.9} parent=0 // pred_region
    _
  $region21: #{discriminator_forward.9} parent=0 // pred_fallthru
    _

</llo_original>
